<compile_context>
chip_gen: v7x
topology: tpu7x:2x2x1
jax: 0.10.0
libtpu: 0.0.40
codegen_flags: <defaults>
</compile_context>

<pallas_src>
import functools

import jax
import jax.numpy as jnp
from jax import lax
from jax.experimental import pallas as pl
from jax.experimental.pallas import tpu as pltpu


# ---------------------------------------------------------------------------
# In-kernel helpers (transposed [C, N] layout: classes on sublanes, nodes on
# lanes). C is tiny and static, so class-axis reductions are unrolled.
# ---------------------------------------------------------------------------
def _softmax_over_classes(x, n_classes, *, approx=False):
    """Softmax over axis 0 of a [C, T] tile == torch.softmax(dim=1) on [N, C]."""
    m = x[0:1]
    for i in range(1, n_classes):
        m = jnp.maximum(m, x[i:i + 1])
    e = jnp.exp(x - m)
    s = e[0:1]
    for i in range(1, n_classes):
        s = s + e[i:i + 1]
    if approx:
        return e * pl.reciprocal(s, approx=True)   # EUP path, essentially free
    return e / s


def _apply_compatibility(acc, comp_t_ref, n_classes, identity_compat):
    """(acc^T applied with the class-compatibility matrix), in [C, T] layout."""
    if identity_compat:
        # The module builds compatibility = ones - eye (frozen), so
        # acc @ comp == rowsum(acc) - acc: cheap VPU form, no MXU dot.
        tot = acc[0:1]
        for i in range(1, n_classes):
            tot = tot + acc[i:i + 1]
        return tot - acc
    # General compatibility matrix: (acc @ comp)^T = comp^T @ acc^T.
    return jnp.dot(comp_t_ref[...], acc, preferred_element_type=jnp.float32)


# ---------------------------------------------------------------------------
# Kernels
# ---------------------------------------------------------------------------
def _linear_softmax_kernel(xt_ref, w_ref, b_ref, out_ref, *, n_classes):
    # forward_no_crf: softmax(layer(X), dim=1), in transposed layout.
    y = jnp.dot(w_ref[...], xt_ref[...],
                preferred_element_type=jnp.float32) + b_ref[...]
    out_ref[...] = _softmax_over_classes(y, n_classes)


def _crf_resident_kernel(xt_ref, w_ref, b_ref, ft_hbm, comp_t_ref, out_ref,
                         ft_vmem, y_s, h_s, q_s, f_sem,
                         *, n_classes, tile_m, identity_compat):
    """Resident plan: F^T lives in a single VMEM scratch copy.

    grid = (n_iter + 1, n_row): pass it==0 computes the Linear per node tile
    (while the one-and-only F^T DMA is in flight); passes it=1..n_iter are the
    mean-field iterations, one [C,N]x[N,tile_m] MXU call per row tile.
    """
    it = pl.program_id(0)
    r = pl.program_id(1)
    last_it = pl.num_programs(0) - 1
    row0 = pl.multiple_of(r * tile_m, tile_m)
    rows = pl.ds(row0, tile_m)

    f_copy = pltpu.make_async_copy(ft_hbm, ft_vmem, f_sem)

    # Kick off the single HBM read of F under the Linear prologue pass.
    @pl.when((it == 0) & (r == 0))
    def _start_f():
        f_copy.start()

    # Prologue pass: y = layer(X) for this node tile (X^T streamed per tile).
    @pl.when(it == 0)
    def _linear():
        y = jnp.dot(w_ref[...], xt_ref[...],
                    preferred_element_type=jnp.float32) + b_ref[...]
        y_s[:, rows] = y
        h_s[:, rows] = y

    @pl.when(it > 0)
    def _mean_field():
        @pl.when((it == 1) & (r == 0))
        def _wait_f():
            f_copy.wait()

        # Once per mean-field iteration: q = softmax(h) over the class axis.
        @pl.when(r == 0)
        def _refresh_q():
            q_s[...] = _softmax_over_classes(
                h_s[...], n_classes, approx=True).astype(q_s.dtype)

        # (F @ q)^T[:, row tile] = q^T @ F^T[:, row tile]: one long MXU call,
        # no reduction grid axis, no accumulator round trip (F is in VMEM).
        acc = jnp.dot(q_s[...], ft_vmem[:, rows],
                      preferred_element_type=jnp.float32)
        h_new = y_s[:, rows] - _apply_compatibility(
            acc, comp_t_ref, n_classes, identity_compat)
        h_s[:, rows] = h_new

        # Emit softmax + HBM writeback only for the last iteration.
        @pl.when(it == last_it)
        def _store():
            out_ref[...] = _softmax_over_classes(h_new, n_classes)


def _crf_stream_kernel(xt_ref, w_ref, b_ref, ft_ref, comp_t_ref, out_ref,
                       y_s, h_s, q_s, acc_s,
                       *, n_classes, tile_m, identity_compat):
    """Streaming plan: F^T streamed as (tile, tile) blocks, reduction axis last.

    grid = (n_iter, n_tiles, n_tiles).  During every r==0 column sweep the
    per-iteration q refresh (and, at it==0, the Linear for that column tile)
    runs lazily so it hides under the F-tile DMAs.
    """
    it = pl.program_id(0)
    r = pl.program_id(1)          # output node (row) tile
    c = pl.program_id(2)          # reduction node (column) tile - last grid axis
    last_it = pl.num_programs(0) - 1
    last_c = pl.num_programs(2) - 1
    row0 = pl.multiple_of(r * tile_m, tile_m)
    col0 = pl.multiple_of(c * tile_m, tile_m)
    rows = pl.ds(row0, tile_m)
    cols = pl.ds(col0, tile_m)

    # First sweep of the first iteration: Linear for this column tile of nodes
    # (X^T streamed per tile; overlaps with the F tile DMAs).
    @pl.when((it == 0) & (r == 0))
    def _linear_col_tile():
        y = jnp.dot(w_ref[...], xt_ref[...],
                    preferred_element_type=jnp.float32) + b_ref[...]
        y_s[:, cols] = y
        h_s[:, cols] = y

    # Lazy q refresh: once per iteration, spread over the r==0 column sweep.
    @pl.when(r == 0)
    def _refresh_q():
        q_s[:, cols] = _softmax_over_classes(
            h_s[:, cols], n_classes, approx=True).astype(q_s.dtype)

    @pl.when(c == 0)
    def _zero_acc():
        acc_s[...] = jnp.zeros_like(acc_s)

    # acc^T[:, row tile] += q^T[:, col tile] @ F^T[col tile, row tile]
    acc_s[...] += jnp.dot(q_s[:, cols], ft_ref[...],
                          preferred_element_type=jnp.float32)

    # Row-tile epilogue: h = y - acc @ compatibility.
    @pl.when(c == last_c)
    def _finish_row_tile():
        h_new = y_s[:, rows] - _apply_compatibility(
            acc_s[...], comp_t_ref, n_classes, identity_compat)
        h_s[:, rows] = h_new

        @pl.when(it == last_it)
        def _store():
            out_ref[...] = _softmax_over_classes(h_new, n_classes)


# ---------------------------------------------------------------------------
# VMEM planning helpers
# ---------------------------------------------------------------------------
def _vmem_limit_bytes():
    # 128 MiB physical on v5e/v6e, 64 MiB on v7x; leave headroom for the
    # compiler's own scratch. Conservative (v7x-sized) fallback if query fails.
    try:
        cap = pltpu.get_tpu_info().vmem_capacity_bytes
    except Exception:
        cap = 64 * 1024 * 1024
    return int(min(0.75 * cap, 100 * 1024 * 1024))


def _padded_bytes(shape, dtype):
    """VMEM footprint of one buffer: last dim padded to 128 lanes, second-to-
    last padded to the sublane multiple implied by the dtype's packing."""
    item = jnp.dtype(dtype).itemsize
    sub = {4: 8, 2: 16, 1: 32}.get(item, 8)
    dims = list(shape)
    if not dims:
        return 128 * item
    dims[-1] = -(-dims[-1] // 128) * 128
    if len(dims) >= 2:
        dims[-2] = -(-dims[-2] // sub) * sub
    n = 1
    for d in dims:
        n *= d
    return n * item


def _resident_plan_bytes(N, D, C, tm):
    b = _padded_bytes((N, N), jnp.bfloat16)              # F^T scratch (1 copy)
    b += 2 * _padded_bytes((C, N), jnp.float32)          # y^T, h^T
    b += _padded_bytes((C, N), jnp.bfloat16)             # q^T
    b += 2 * _padded_bytes((D, tm), jnp.bfloat16)        # X^T tile (x2 buffers)
    b += 2 * _padded_bytes((C, tm), jnp.float32)         # out tile (x2 buffers)
    b += 2 * _padded_bytes((C, D), jnp.bfloat16)         # W
    b += 2 * _padded_bytes((C, 1), jnp.float32)          # b
    b += 2 * _padded_bytes((C, C), jnp.float32)          # comp^T
    return b


def _stream_plan_bytes(N, D, C, t):
    b = 2 * _padded_bytes((t, t), jnp.bfloat16)          # F^T tile (x2 buffers)
    b += 2 * _padded_bytes((D, t), jnp.bfloat16)         # X^T tile (x2 buffers)
    b += 2 * _padded_bytes((C, N), jnp.float32)          # y^T, h^T
    b += _padded_bytes((C, N), jnp.bfloat16)             # q^T
    b += _padded_bytes((C, t), jnp.float32)              # acc^T
    b += 2 * _padded_bytes((C, t), jnp.float32)          # out tile (x2 buffers)
    b += 2 * _padded_bytes((C, D), jnp.bfloat16)
    b += 2 * _padded_bytes((C, 1), jnp.float32)
    b += 2 * _padded_bytes((C, C), jnp.float32)
    return b


def _pick_tile(n, prefer):
    for t in prefer:
        if t <= n and n % t == 0:
            return t
    return n            # small / ragged N: single full-extent block (legal)


def _pick_stream_tile(N, D, C, budget):
    # Streaming is HBM-roofline bound: prefer big F tiles (2048/1024) so the
    # tile DMA dominates the ~0.35us per-grid-step overhead (review item).
    for t in (2048, 1024, 512, 256, 128):
        if t <= N and N % t == 0 and _stream_plan_bytes(N, D, C, t) <= budget:
            return t
    return N


# ---------------------------------------------------------------------------
# Wrapper
# ---------------------------------------------------------------------------
def flexible_classifier_forward(X, W, b, f=None, smooth_weight=None,
                                compatibility=None, *, is_crf=True, n_iter=3,
                                tile=None, force_stream_f=False):
    """Fused FlexibleClassifier forward (Linear -> optional CRF -> softmax).

    X: [N, D]; W: [C, D], b: [C] (Linear(D, C)); f: [K, N, N]; smooth_weight: [K].
    Returns class probabilities [N, C] (softmax over dim=1, like the module).
    """
    N, D = X.shape
    C = W.shape[0]

    # Transposed, lane-dense layout: nodes on the 128-lane axis; bf16 matmul
    # inputs, f32 accumulation.
    xt = X.T.astype(jnp.bfloat16)               # [D, N]
    wt = W.astype(jnp.bfloat16)                 # [C, D]
    b2 = b.astype(jnp.float32).reshape(C, 1)    # [C, 1]

    vmem_limit = _vmem_limit_bytes()
    budget = int(0.9 * vmem_limit)

    # ---------------- no-CRF path -------------------------------------------
    if (not is_crf) or n_iter <= 0:
        tn = tile or _pick_tile(N, (512, 256, 128))
        assert N % tn == 0, "pad N to a multiple of the tile size"
        out_t = pl.pallas_call(
            functools.partial(_linear_softmax_kernel, n_classes=C),
            out_shape=jax.ShapeDtypeStruct((C, N), jnp.float32),
            grid=(N // tn,),
            in_specs=[
                pl.BlockSpec((D, tn), lambda i: (0, i)),
                pl.BlockSpec((C, D), lambda i: (0, 0)),
                pl.BlockSpec((C, 1), lambda i: (0, 0)),
            ],
            out_specs=pl.BlockSpec((C, tn), lambda i: (0, i)),
            compiler_params=pltpu.CompilerParams(
                dimension_semantics=("parallel",),
                vmem_limit_bytes=vmem_limit),
        )(xt, wt, b2)
        return out_t.T

    # ---------------- CRF path ----------------------------------------------
    f = jnp.asarray(f)
    smooth_weight = jnp.asarray(smooth_weight)
    K = f.shape[0]
    assert f.shape == (K, N, N) and smooth_weight.shape == (K,)

    # Fold the K kernels + smooth weights once:
    #   sum_k w_k (f_k @ q) == (sum_k w_k f_k) @ q
    # Stored transposed (for the [C, N] layout) and cast to bf16.
    ft = jnp.einsum('k,kij->ji', smooth_weight.astype(jnp.float32),
                    f.astype(jnp.float32)).astype(jnp.bfloat16)    # [N, N] = F^T
    # TODO(synk): fp8(e4m3) F^T on v7x (halves F bytes); needs a numerics pass.

    identity_compat = compatibility is None
    if identity_compat:
        # Exactly how the module builds its frozen `compatibility` parameter.
        compatibility = (jnp.ones((C, C), jnp.float32)
                         - jnp.eye(C, dtype=jnp.float32))
    comp_t = jnp.asarray(compatibility, jnp.float32).T

    # ---- plan selection: resident F (one HBM read total) vs streamed F -----
    tm_res = tile or _pick_tile(N, (512, 256, 128))
    assert N % tm_res == 0, "pad N to a multiple of the tile size"
    f_resident = ((not force_stream_f)
                  and _resident_plan_bytes(N, D, C, tm_res) <= budget)

    if f_resident:
        kernel = functools.partial(
            _crf_resident_kernel, n_classes=C, tile_m=tm_res,
            identity_compat=identity_compat)
        out_t = pl.pallas_call(
            kernel,
            out_shape=jax.ShapeDtypeStruct((C, N), jnp.float32),
            grid_spec=pltpu.PrefetchScalarGridSpec(
                num_scalar_prefetch=0,
                grid=(n_iter + 1, N // tm_res),    # pass 0 = Linear prologue
                in_specs=[
                    pl.BlockSpec((D, tm_res), lambda it, r: (0, r)),   # X^T tile
                    pl.BlockSpec((C, D), lambda it, r: (0, 0)),        # W
                    pl.BlockSpec((C, 1), lambda it, r: (0, 0)),        # b
                    pl.BlockSpec(memory_space=pl.ANY),                 # F^T (HBM)
                    pl.BlockSpec((C, C), lambda it, r: (0, 0)),        # comp^T
                ],
                out_specs=pl.BlockSpec((C, tm_res), lambda it, r: (0, r)),
                scratch_shapes=[
                    pltpu.VMEM((N, N), jnp.bfloat16),   # F^T, single VMEM copy
                    pltpu.VMEM((C, N), jnp.float32),    # y^T (across grid)
                    pltpu.VMEM((C, N), jnp.float32),    # h^T
                    pltpu.VMEM((C, N), jnp.bfloat16),   # q^T = softmax(h^T)
                    pltpu.SemaphoreType.DMA,            # F^T copy semaphore
                ]),
            compiler_params=pltpu.CompilerParams(
                # y/h/q/F live in per-core VMEM scratch shared across row tiles
                # AND iterations -> no grid axis may be sharded across cores.
                # TODO(synk): v7x dual-TensorCore row split with a per-iteration
                # cross-core q^T exchange.
                dimension_semantics=("arbitrary", "arbitrary"),
                vmem_limit_bytes=vmem_limit),
        )(xt, wt, b2, ft, comp_t)
        return out_t.T

    # Streamed F^T tiles through the BlockSpec double-buffer, reduction last.
    tm = tile or _pick_stream_tile(N, D, C, budget)
    assert N % tm == 0, "pad N to a multiple of the tile size"
    n_t = N // tm
    kernel = functools.partial(
        _crf_stream_kernel, n_classes=C, tile_m=tm,
        identity_compat=identity_compat)
    out_t = pl.pallas_call(
        kernel,
        out_shape=jax.ShapeDtypeStruct((C, N), jnp.float32),
        grid_spec=pltpu.PrefetchScalarGridSpec(
            num_scalar_prefetch=0,
            grid=(n_iter, n_t, n_t),
            in_specs=[
                pl.BlockSpec((D, tm), lambda it, r, c: (0, c)),   # X^T col tile
                pl.BlockSpec((C, D), lambda it, r, c: (0, 0)),    # W
                pl.BlockSpec((C, 1), lambda it, r, c: (0, 0)),    # b
                pl.BlockSpec((tm, tm), lambda it, r, c: (c, r)),  # F^T tile
                pl.BlockSpec((C, C), lambda it, r, c: (0, 0)),    # comp^T
            ],
            out_specs=pl.BlockSpec((C, tm), lambda it, r, c: (0, r)),
            scratch_shapes=[
                pltpu.VMEM((C, N), jnp.float32),     # y^T (kept across grid)
                pltpu.VMEM((C, N), jnp.float32),     # h^T
                pltpu.VMEM((C, N), jnp.bfloat16),    # q^T
                pltpu.VMEM((C, tm), jnp.float32),    # acc^T for the row tile
            ]),
        compiler_params=pltpu.CompilerParams(
            dimension_semantics=("arbitrary", "arbitrary", "arbitrary"),
            vmem_limit_bytes=vmem_limit),
    )(xt, wt, b2, ft, comp_t)
    return out_t.T              # back to [N, C] like the PyTorch module


# ---------------------------------------------------------------------------
# Pure-JAX reference (mirrors the module; matmul inputs cast to bf16 with f32
# accumulation exactly like the kernel's quantization choice).
# ---------------------------------------------------------------------------
def _reference_forward(X, W, b, f=None, smooth_weight=None, compatibility=None,
                       *, is_crf=True, n_iter=3):
    bf16 = jnp.bfloat16
    y = jnp.dot(X.astype(bf16), W.astype(bf16).T,
                preferred_element_type=jnp.float32) + b
    if (not is_crf) or n_iter <= 0:
        return jax.nn.softmax(y, axis=1)
    C = W.shape[0]
    if compatibility is None:
        compatibility = jnp.ones((C, C), jnp.float32) - jnp.eye(C)
    F = jnp.einsum('k,kij->ij', smooth_weight, jnp.asarray(f)).astype(bf16)
    h = y
    for _ in range(n_iter):
        q = jax.nn.softmax(h, axis=1)
        acc = jnp.dot(F, q.astype(bf16), preferred_element_type=jnp.float32)
        h = y - jnp.dot(acc, compatibility, precision=lax.Precision.HIGHEST)
    return jax.nn.softmax(h, axis=1)


if __name__ == "__main__":
    # Shapes large enough that the (8,128)-tiled, gridded pipeline is actually
    # exercised, but still small and fast: 1024 nodes, 64 features, 2 classes,
    # 3 affinity kernels, 3 mean-field iterations.
    N, D = 1024, 64
    n_classes = 2
    n_kernels = 3
    n_iter = 3

    key = jax.random.PRNGKey(0)
    kx, kw, kb, kf, ks = jax.random.split(key, 5)
    X = jax.random.normal(kx, (N, D), dtype=jnp.float32)
    W = jax.random.normal(kw, (n_classes, D), dtype=jnp.float32) * 0.1
    b = jax.random.normal(kb, (n_classes,), dtype=jnp.float32) * 0.1
    f = jax.random.uniform(kf, (n_kernels, N, N), dtype=jnp.float32) / N
    smooth_weight = jax.random.uniform(ks, (n_kernels,), dtype=jnp.float32)

    ref_crf = _reference_forward(X, W, b, f, smooth_weight,
                                 is_crf=True, n_iter=n_iter)

    # 1) CRF path, resident plan: F^T DMA'd once into a single VMEM copy,
    #    grid=(n_iter+1, row_tiles), no reduction grid axis.
    out_res = jax.block_until_ready(flexible_classifier_forward(
        X, W, b, f, smooth_weight, is_crf=True, n_iter=n_iter))
    assert out_res.shape == (N, n_classes)
    assert jnp.allclose(out_res, ref_crf, atol=3e-3, rtol=3e-3)

    # 2) CRF path, streaming plan forced (large-N / v7x plan), small tile to
    #    exercise the multi-tile grid, lazy q refresh and tiled Linear.
    out_str = jax.block_until_ready(flexible_classifier_forward(
        X, W, b, f, smooth_weight, is_crf=True, n_iter=n_iter,
        tile=256, force_stream_f=True))
    assert jnp.allclose(out_str, ref_crf, atol=3e-3, rtol=3e-3)

    # 3) Plain (no-CRF) path.
    out_plain = jax.block_until_ready(flexible_classifier_forward(
        X, W, b, f, smooth_weight, is_crf=False))
    ref_plain = _reference_forward(X, W, b, f, smooth_weight, is_crf=False)
    assert jnp.allclose(out_plain, ref_plain, atol=3e-3, rtol=3e-3)

    print("KERNEL_OK")
</pallas_src>

<mosaic_0001>
module attributes {stable_mosaic.version = 11 : i64} {
  func.func @_crf_resident_kernel(%arg0: i32, %arg1: i32, %arg2: memref<64x512xbf16, #tpu.memory_space<vmem>>, %arg3: memref<2x64xbf16, #tpu.memory_space<vmem>>, %arg4: memref<2x1xf32, #tpu.memory_space<vmem>>, %arg5: memref<1024x1024xbf16, #tpu.memory_space<any>>, %arg6: memref<2x2xf32, #tpu.memory_space<vmem>>, %arg7: memref<2x512xf32, #tpu.memory_space<vmem>>, %arg8: memref<1024x1024xbf16, #tpu.memory_space<vmem>>, %arg9: memref<2x1024xf32, #tpu.memory_space<vmem>>, %arg10: memref<2x1024xf32, #tpu.memory_space<vmem>>, %arg11: memref<2x1024xbf16, #tpu.memory_space<vmem>>, %arg12: memref<!tpu.dma_semaphore, #tpu.memory_space<semaphore_mem>>) attributes {dimension_semantics = [#tpu.dimension_semantics<arbitrary>, #tpu.dimension_semantics<arbitrary>], iteration_bounds = array<i64: 4, 2>, scalar_prefetch = 0 : i64, scratch_operands = 5 : i64, tpu.core_type = #tpu.core_type<tc>, window_params = [{transform_indices = @transform_0, window_bounds = array<i64: 64, 512>}, {pipeline_mode = #tpu.pipeline_mode<synchronous>, transform_indices = @transform_1, window_bounds = array<i64: 2, 64>}, {pipeline_mode = #tpu.pipeline_mode<synchronous>, transform_indices = @transform_2, window_bounds = array<i64: 2, 1>}, {}, {pipeline_mode = #tpu.pipeline_mode<synchronous>, transform_indices = @transform_4, window_bounds = array<i64: 2, 2>}, {transform_indices = @transform_5, window_bounds = array<i64: 2, 512>}]} {
    %c512_i32 = arith.constant 512 : i32
    %0 = arith.muli %arg1, %c512_i32 : i32
    %1 = tpu.assume_multiple %0, 512 : i32
    %c0_i32 = arith.constant 0 : i32
    %2 = arith.cmpi eq, %arg0, %c0_i32 : i32
    %c0_i32_0 = arith.constant 0 : i32
    %3 = arith.cmpi eq, %arg1, %c0_i32_0 : i32
    %4 = arith.andi %2, %3 : i1
    %5 = arith.extui %4 : i1 to i32
    %c0_i32_1 = arith.constant 0 : i32
    %6 = arith.cmpi ne, %5, %c0_i32_1 : i32
    scf.if %6 {
      tpu.enqueue_dma source(%arg5 : memref<1024x1024xbf16, #tpu.memory_space<any>>) target(%arg8 : memref<1024x1024xbf16, #tpu.memory_space<vmem>>) target_semaphore(%arg12 : memref<!tpu.dma_semaphore, #tpu.memory_space<semaphore_mem>>)
    } else {
    }
    %c0_i32_2 = arith.constant 0 : i32
    %7 = arith.cmpi eq, %arg0, %c0_i32_2 : i32
    %8 = arith.extui %7 : i1 to i32
    %c0_i32_3 = arith.constant 0 : i32
    %9 = arith.cmpi ne, %8, %c0_i32_3 : i32
    scf.if %9 {
      %c0 = arith.constant 0 : index
      %c0_6 = arith.constant 0 : index
      %13 = vector.load %arg3[%c0, %c0_6] : memref<2x64xbf16, #tpu.memory_space<vmem>>, vector<2x64xbf16>
      %c0_7 = arith.constant 0 : index
      %c0_8 = arith.constant 0 : index
      %14 = vector.load %arg2[%c0_7, %c0_8] : memref<64x512xbf16, #tpu.memory_space<vmem>>, vector<64x512xbf16>
      %cst = arith.constant dense<0.000000e+00> : vector<2x512xf32>
      %15 = tpu.matmul %13, %14, %cst {dimension_numbers = #tpu.dot_dimension_numbers<[1], [0], [0], [1], [0, 0, 1, 1], [], []>} : vector<2x64xbf16>, vector<64x512xbf16>, vector<2x512xf32> -> vector<2x512xf32>
      %c0_9 = arith.constant 0 : index
      %c0_10 = arith.constant 0 : index
      %16 = vector.load %arg4[%c0_9, %c0_10] : memref<2x1xf32, #tpu.memory_space<vmem>>, vector<2x1xf32>
      %17 = vector.broadcast %16 : vector<2x1xf32> to vector<2x512xf32>
      %18 = arith.addf %15, %17 : vector<2x512xf32>
      %c0_11 = arith.constant 0 : index
      %19 = arith.index_cast %1 : i32 to index
      %20 = vector.load %arg9[%c0_11, %19] : memref<2x1024xf32, #tpu.memory_space<vmem>>, vector<2x512xf32>
      tpu.vector_store %arg9[%c0_11, %19], %18 {strides = array<i32>} : memref<2x1024xf32, #tpu.memory_space<vmem>>, vector<2x512xf32>,
      %c0_12 = arith.constant 0 : index
      %21 = arith.index_cast %1 : i32 to index
      %22 = vector.load %arg10[%c0_12, %21] : memref<2x1024xf32, #tpu.memory_space<vmem>>, vector<2x512xf32>
      tpu.vector_store %arg10[%c0_12, %21], %18 {strides = array<i32>} : memref<2x1024xf32, #tpu.memory_space<vmem>>, vector<2x512xf32>,
    } else {
    }
    %c0_i32_4 = arith.constant 0 : i32
    %10 = arith.cmpi sgt, %arg0, %c0_i32_4 : i32
    %11 = arith.extui %10 : i1 to i32
    %c0_i32_5 = arith.constant 0 : i32
    %12 = arith.cmpi ne, %11, %c0_i32_5 : i32
    scf.if %12 {
      %c1_i32 = arith.constant 1 : i32
      %13 = arith.cmpi eq, %arg0, %c1_i32 : i32
      %c0_i32_6 = arith.constant 0 : i32
      %14 = arith.cmpi eq, %arg1, %c0_i32_6 : i32
      %15 = arith.andi %13, %14 : i1
      %16 = arith.extui %15 : i1 to i32
      %c0_i32_7 = arith.constant 0 : i32
      %17 = arith.cmpi ne, %16, %c0_i32_7 : i32
      scf.if %17 {
        tpu.wait_dma2 semaphore(%arg12 : memref<!tpu.dma_semaphore, #tpu.memory_space<semaphore_mem>>) src(%arg5 : memref<1024x1024xbf16, #tpu.memory_space<any>>) dst(%arg8 : memref<1024x1024xbf16, #tpu.memory_space<vmem>>)
      } else {
      }
      %c0_i32_8 = arith.constant 0 : i32
      %18 = arith.cmpi eq, %arg1, %c0_i32_8 : i32
      %19 = arith.extui %18 : i1 to i32
      %c0_i32_9 = arith.constant 0 : i32
      %20 = arith.cmpi ne, %19, %c0_i32_9 : i32
      scf.if %20 {
        %c0_15 = arith.constant 0 : index
        %c0_16 = arith.constant 0 : index
        %38 = vector.load %arg10[%c0_15, %c0_16] : memref<2x1024xf32, #tpu.memory_space<vmem>>, vector<2x1024xf32>
        %39 = vector.extract_strided_slice %38 {offsets = [0, 0], sizes = [1, 1024], strides = [1, 1]} : vector<2x1024xf32> to vector<1x1024xf32>
        %40 = vector.extract_strided_slice %38 {offsets = [1, 0], sizes = [1, 1024], strides = [1, 1]} : vector<2x1024xf32> to vector<1x1024xf32>
        %41 = arith.maximumf %39, %40 : vector<1x1024xf32>
        %42 = vector.broadcast %41 : vector<1x1024xf32> to vector<2x1024xf32>
        %43 = arith.subf %38, %42 : vector<2x1024xf32>
        %44 = math.exp %43 : vector<2x1024xf32>
        %45 = vector.extract_strided_slice %44 {offsets = [0, 0], sizes = [1, 1024], strides = [1, 1]} : vector<2x1024xf32> to vector<1x1024xf32>
        %46 = vector.extract_strided_slice %44 {offsets = [1, 0], sizes = [1, 1024], strides = [1, 1]} : vector<2x1024xf32> to vector<1x1024xf32>
        %47 = arith.addf %45, %46 : vector<1x1024xf32>
        %48 = tpu.reciprocal %47 {approx = true} : vector<1x1024xf32> -> vector<1x1024xf32>
        %49 = vector.broadcast %48 : vector<1x1024xf32> to vector<2x1024xf32>
        %50 = arith.mulf %44, %49 : vector<2x1024xf32>
        %51 = arith.truncf %50 : vector<2x1024xf32> to vector<2x1024xbf16>
        %c0_17 = arith.constant 0 : index
        %c0_18 = arith.constant 0 : index
        %52 = vector.load %arg11[%c0_17, %c0_18] : memref<2x1024xbf16, #tpu.memory_space<vmem>>, vector<2x1024xbf16>
        tpu.vector_store %arg11[%c0_17, %c0_18], %51 {strides = array<i32>} : memref<2x1024xbf16, #tpu.memory_space<vmem>>, vector<2x1024xbf16>,
      } else {
      }
      %c0 = arith.constant 0 : index
      %c0_10 = arith.constant 0 : index
      %21 = vector.load %arg11[%c0, %c0_10] : memref<2x1024xbf16, #tpu.memory_space<vmem>>, vector<2x1024xbf16>
      %c0_11 = arith.constant 0 : index
      %22 = arith.index_cast %1 : i32 to index
      %23 = vector.load %arg8[%c0_11, %22] : memref<1024x1024xbf16, #tpu.memory_space<vmem>>, vector<1024x512xbf16>
      %cst = arith.constant dense<0.000000e+00> : vector<2x512xf32>
      %24 = tpu.matmul %21, %23, %cst {dimension_numbers = #tpu.dot_dimension_numbers<[1], [0], [0], [1], [0, 0, 1, 1], [], []>} : vector<2x1024xbf16>, vector<1024x512xbf16>, vector<2x512xf32> -> vector<2x512xf32>
      %c0_12 = arith.constant 0 : index
      %25 = arith.index_cast %1 : i32 to index
      %26 = vector.load %arg9[%c0_12, %25] : memref<2x1024xf32, #tpu.memory_space<vmem>>, vector<2x512xf32>
      %27 = vector.extract_strided_slice %24 {offsets = [0, 0], sizes = [1, 512], strides = [1, 1]} : vector<2x512xf32> to vector<1x512xf32>
      %28 = vector.extract_strided_slice %24 {offsets = [1, 0], sizes = [1, 512], strides = [1, 1]} : vector<2x512xf32> to vector<1x512xf32>
      %29 = arith.addf %27, %28 : vector<1x512xf32>
      %30 = vector.broadcast %29 : vector<1x512xf32> to vector<2x512xf32>
      %31 = arith.subf %30, %24 : vector<2x512xf32>
      %32 = arith.subf %26, %31 : vector<2x512xf32>
      %c0_13 = arith.constant 0 : index
      %33 = arith.index_cast %1 : i32 to index
      %34 = vector.load %arg10[%c0_13, %33] : memref<2x1024xf32, #tpu.memory_space<vmem>>, vector<2x512xf32>
      tpu.vector_store %arg10[%c0_13, %33], %32 {strides = array<i32>} : memref<2x1024xf32, #tpu.memory_space<vmem>>, vector<2x512xf32>,
      %c3_i32 = arith.constant 3 : i32
      %35 = arith.cmpi eq, %arg0, %c3_i32 : i32
      %36 = arith.extui %35 : i1 to i32
      %c0_i32_14 = arith.constant 0 : i32
      %37 = arith.cmpi ne, %36, %c0_i32_14 : i32
      scf.if %37 {
        %38 = vector.extract_strided_slice %32 {offsets = [0, 0], sizes = [1, 512], strides = [1, 1]} : vector<2x512xf32> to vector<1x512xf32>
        %39 = vector.extract_strided_slice %32 {offsets = [1, 0], sizes = [1, 512], strides = [1, 1]} : vector<2x512xf32> to vector<1x512xf32>
        %40 = arith.maximumf %38, %39 : vector<1x512xf32>
        %41 = vector.broadcast %40 : vector<1x512xf32> to vector<2x512xf32>
        %42 = arith.subf %32, %41 : vector<2x512xf32>
        %43 = math.exp %42 : vector<2x512xf32>
        %44 = vector.extract_strided_slice %43 {offsets = [0, 0], sizes = [1, 512], strides = [1, 1]} : vector<2x512xf32> to vector<1x512xf32>
        %45 = vector.extract_strided_slice %43 {offsets = [1, 0], sizes = [1, 512], strides = [1, 1]} : vector<2x512xf32> to vector<1x512xf32>
        %46 = arith.addf %44, %45 : vector<1x512xf32>
        %47 = vector.broadcast %46 : vector<1x512xf32> to vector<2x512xf32>
        %48 = arith.divf %43, %47 : vector<2x512xf32>
        %c0_15 = arith.constant 0 : index
        %c0_16 = arith.constant 0 : index
        %49 = vector.load %arg7[%c0_15, %c0_16] : memref<2x512xf32, #tpu.memory_space<vmem>>, vector<2x512xf32>
        tpu.vector_store %arg7[%c0_15, %c0_16], %48 {strides = array<i32>} : memref<2x512xf32, #tpu.memory_space<vmem>>, vector<2x512xf32>,
      } else {
      }
    } else {
    }
    return
  }
  func.func @transform_0(%arg0: i32, %arg1: i32) -> (i32, i32) {
    %c0_i32 = arith.constant 0 : i32
    %c0_i32_0 = arith.constant 0 : i32
    return %c0_i32, %arg1 : i32, i32
  }
  func.func @transform_1(%arg0: i32, %arg1: i32) -> (i32, i32) {
    %c0_i32 = arith.constant 0 : i32
    %c0_i32_0 = arith.constant 0 : i32
    %c0_i32_1 = arith.constant 0 : i32
    return %c0_i32, %c0_i32_0 : i32, i32
  }
  func.func @transform_2(%arg0: i32, %arg1: i32) -> (i32, i32) {
    %c0_i32 = arith.constant 0 : i32
    %c0_i32_0 = arith.constant 0 : i32
    %c0_i32_1 = arith.constant 0 : i32
    return %c0_i32, %c0_i32_0 : i32, i32
  }
  func.func @transform_4(%arg0: i32, %arg1: i32) -> (i32, i32) {
    %c0_i32 = arith.constant 0 : i32
    %c0_i32_0 = arith.constant 0 : i32
    %c0_i32_1 = arith.constant 0 : i32
    return %c0_i32, %c0_i32_0 : i32, i32
  }
  func.func @transform_5(%arg0: i32, %arg1: i32) -> (i32, i32) {
    %c0_i32 = arith.constant 0 : i32
    %c0_i32_0 = arith.constant 0 : i32
    return %c0_i32, %arg1 : i32, i32
  }
}

</mosaic_0001>

<llo_original>
// kernel: tpu_custom_call.1
$region0: #{tpu_custom_call.1}
  #allocation0 [shape = 'u32[]', space=smem, size = 0x4, offset = 0x4, fixed_abs, tag = 'smem constant byte address 0x4 - core index']
  #allocation1 [shape = 'u32[144,128]{1,0:T(1,128)}', space=vmem, size = 0x12000, scoped, tag = 'internal scratch']
  #allocation2 [shape = 'bf16[1024,1024]{1,0:T(16,128)(2,1)}', space=vmem, size = 0x200000, scoped, tag = 'scratch operand']
  #allocation3 [shape = 'f32[2,1024]{1,0:T(2,128)}', space=vmem, size = 0x2000, scoped, tag = 'scratch operand']
  #allocation4 [shape = 'f32[2,1024]{1,0:T(2,128)}', space=vmem, size = 0x2000, scoped, tag = 'scratch operand']
  #allocation5 [shape = 'bf16[2,1024]{1,0:T(2,128)(2,1)}', space=vmem, size = 0x1000, scoped, tag = 'scratch operand']
  #allocation6 [shape = 's32[1]{0}', space=sflag, size = 0x4, scoped, tag = 'scratch operand']
  #allocation14 [shape = 's32[]', space=sflag, size = 0x4, offset = 0, fixed_abs, tag = 'sflag constant byte address 0x0 - dummy sync flag']
  %s0 = inlined_call_operand.hbm [shape: bf16[64,1024], index: 0, kind: input, shape index: {}]
  %s1 = inlined_call_operand.hbm [shape: bf16[2,64], index: 1, kind: input, shape index: {}]
  %s2 = inlined_call_operand.vmem [shape: f32[2,1], index: 2, kind: input, shape index: {}]
  %s3 = inlined_call_operand.hbm [shape: bf16[1024,1024], index: 3, kind: input, shape index: {}]
  %s4 = inlined_call_operand.hbm [shape: f32[2,2], index: 4, kind: input, shape index: {}]
  %s5 = inlined_call_operand.hbm [shape: f32[2,1024], index: 5, kind: output, shape index: {}]
  %s6 = sld [smem:[#allocation0]]
  $region85: #{tpu_custom_call.1} parent=0
    _
  %s8 = ssub.s32 1, %s6
  %s9 = scalar_select 0, %s8, %s6
  $region1: #{tpu_custom_call.1} parent=0
    #allocation7 [shape = 'u8[131072]{0}', space=vmem, size = 0x20000, scoped, tag = 'input window, operand 0']
    #allocation8 [shape = 's32[2]{0}', space=sflag, size = 0x8, scoped, tag = 'scoped memory for tpu_custom_call.1']
    #allocation9 [shape = 's32[2]{0}', space=sflag, size = 0x8, scoped, tag = 'scoped memory for tpu_custom_call.1']
    #allocation10 [shape = 'u8[512]{0}', space=vmem, size = 0x400, scoped, tag = 'input window, operand 1, single buffered']
    #allocation11 [shape = 's32[1]{0}', space=sflag, size = 0x4, scoped, tag = 'scoped memory for tpu_custom_call.1']
    #allocation12 [shape = 'u8[1024]{0}', space=vmem, size = 0x400, scoped, tag = 'input window, operand 4, single buffered']
    #allocation13 [shape = 'u8[8192]{0}', space=vmem, size = 0x2000, scoped, tag = 'output window, operand 0']
    %10 = vsyncpa [#allocation8], 0
    %s11 = scalar_lea.sflag [#allocation8], 1
    %12 = vsyncpa %s11, 0
    %13 = vsyncpa [#allocation11], 0
    %14 = vsyncpa [#allocation9], 0
    %s15 = scalar_lea.sflag [#allocation9], 1
    %16 = vsyncpa %s15, 0
    loop: start=0, step=1, limit=10
    $region2: #{tpu_custom_call.1} parent=1 // loop_pre_header
      _
    $region3: #{tpu_custom_call.1} parent=1 // loop_header
      %s18 = sphi 0, %s22
      %p19 = scmp.ge.s32.totalorder %s18, 10
      %s25 = sphi 0, %s37
      %s26 = sphi 0, %s33
      %s27 = sphi 0, %s25
      %s28 = sphi 0, %s26
      %s29 = sphi 0, %s27
      %s30 = sphi 0, %s28
      %s40 = sphi 0, %s42
      %s43 = sphi 0, %s40
      %s44 = sphi 0, %s43
      %s60 = sphi 0, %s44
      %s64 = sphi 0, %s64
      %s66 = sphi 0, %s64
      %s67 = sphi 0, %s66
      %s81 = sphi 0, %s67
      %s85 = sphi 0, %s85
      %s87 = sphi 0, %s85
      %s88 = sphi 0, %s87
      %s102 = sphi 0, %s88
      %s106 = sphi 0, %s106
      %s108 = sphi 0, %s106
      %s109 = sphi 0, %s108
      %s123 = sphi 0, %s109
      %s129 = sphi 0, %s131
      %s132 = sphi 0, %s129
      %s133 = sphi 0, %s132
      %s149 = sphi 0, %s133
    $region4: #{tpu_custom_call.1} parent=1 // loop_header_branch
      %21 = sbr.rel (%p19) target = $region8
    $region5: #{tpu_custom_call.1} parent=1 // loop_body
      %s23 = ssub.s32 %s18, 1
      %s24 = ssub.s32 %s18, 2
      %s31 = sadd.s32 1, %s26
      %p32 = scmp.ge.s32.totalorder %s31, 2
      %s33 = scalar_select %p32, 0, %s31
      %s34 = sadd.s32 1, %s25
      %s35 = scalar_select %p32, %s34, %s25
      %p36 = scmp.ge.s32.totalorder %s35, 4
      %s37 = scalar_select %p36, 0, %s35
      %s38 = ssub.s32 %s26, %s33
      %p39 = scmp.eq.s32.totalorder %s38, 0
      %s41 = sadd.s32 %s40, 1
      %s42 = scalar_select %p39, %s40, %s41
      %p45 = pneg %p39
      %p46 = scmp.eq.s32.totalorder %s18, 7
      %p47 = por %p45, %p46
      %p48 = scmp.ne.s32.totalorder %s40, %s43
      %p49 = scmp.eq.s32.totalorder %s18, 0
      %p50 = por %p48, %p49
      %p51 = scmp.ne.s32.totalorder %s40, %s43
      %p52 = scmp.eq.s32.totalorder %s23, 7
      %p53 = por %p51, %p52
      %p54 = scmp.ne.s32.totalorder %s43, %s44
      %p55 = scmp.eq.s32.totalorder %s23, 0
      %p56 = por %p54, %p55
      %p57 = scmp.ne.s32.totalorder %s43, %s44
      %p58 = scmp.eq.s32.totalorder %s24, 7
      %p59 = por %p57, %p58
      %p61 = scmp.ne.s32.totalorder %s44, %s60
      %p62 = scmp.eq.s32.totalorder %s24, 0
      %p63 = por %p61, %p62
      %s65 = sadd.s32 %s64, 1
      %p68 = scmp.eq.s32.totalorder %s18, 7
      %p69 = scmp.ne.s32.totalorder %s64, %s66
      %p70 = scmp.eq.s32.totalorder %s18, 0
      %p71 = por %p69, %p70
      %p72 = scmp.ne.s32.totalorder %s64, %s66
      %p73 = scmp.eq.s32.totalorder %s23, 7
      %p74 = por %p72, %p73
      %p75 = scmp.ne.s32.totalorder %s66, %s67
      %p76 = scmp.eq.s32.totalorder %s23, 0
      %p77 = por %p75, %p76
      %p78 = scmp.ne.s32.totalorder %s66, %s67
      %p79 = scmp.eq.s32.totalorder %s24, 7
      %p80 = por %p78, %p79
      %p82 = scmp.ne.s32.totalorder %s67, %s81
      %p83 = scmp.eq.s32.totalorder %s24, 0
      %p84 = por %p82, %p83
      %s86 = sadd.s32 %s85, 1
      %p89 = scmp.eq.s32.totalorder %s18, 7
      %p90 = scmp.ne.s32.totalorder %s85, %s87
      %p91 = scmp.eq.s32.totalorder %s18, 0
      %p92 = por %p90, %p91
      %p93 = scmp.ne.s32.totalorder %s85, %s87
      %p94 = scmp.eq.s32.totalorder %s23, 7
      %p95 = por %p93, %p94
      %p96 = scmp.ne.s32.totalorder %s87, %s88
      %p97 = scmp.eq.s32.totalorder %s23, 0
      %p98 = por %p96, %p97
      %p99 = scmp.ne.s32.totalorder %s87, %s88
      %p100 = scmp.eq.s32.totalorder %s24, 7
      %p101 = por %p99, %p100
      %p103 = scmp.ne.s32.totalorder %s88, %s102
      %p104 = scmp.eq.s32.totalorder %s24, 0
      %p105 = por %p103, %p104
      %s107 = sadd.s32 %s106, 1
      %p110 = scmp.eq.s32.totalorder %s18, 7
      %p111 = scmp.ne.s32.totalorder %s106, %s108
      %p112 = scmp.eq.s32.totalorder %s18, 0
      %p113 = por %p111, %p112
      %p114 = scmp.ne.s32.totalorder %s106, %s108
      %p115 = scmp.eq.s32.totalorder %s23, 7
      %p116 = por %p114, %p115
      %p117 = scmp.ne.s32.totalorder %s108, %s109
      %p118 = scmp.eq.s32.totalorder %s23, 0
      %p119 = por %p117, %p118
      %p120 = scmp.ne.s32.totalorder %s108, %s109
      %p121 = scmp.eq.s32.totalorder %s24, 7
      %p122 = por %p120, %p121
      %p124 = scmp.ne.s32.totalorder %s109, %s123
      %p125 = scmp.eq.s32.totalorder %s24, 0
      %p126 = por %p124, %p125
      %s127 = ssub.s32 %s26, %s33
      %p128 = scmp.eq.s32.totalorder %s127, 0
      %s130 = sadd.s32 %s129, 1
      %s131 = scalar_select %p128, %s129, %s130
      %p134 = pneg %p128
      %p135 = scmp.eq.s32.totalorder %s18, 7
      %p136 = por %p134, %p135
      %p137 = scmp.ne.s32.totalorder %s129, %s132
      %p138 = scmp.eq.s32.totalorder %s18, 0
      %p139 = por %p137, %p138
      %p140 = scmp.ne.s32.totalorder %s129, %s132
      %p141 = scmp.eq.s32.totalorder %s23, 7
      %p142 = por %p140, %p141
      %p143 = scmp.ne.s32.totalorder %s132, %s133
      %p144 = scmp.eq.s32.totalorder %s23, 0
      %p145 = por %p143, %p144
      %p146 = scmp.ne.s32.totalorder %s132, %s133
      %p147 = scmp.eq.s32.totalorder %s24, 7
      %p148 = por %p146, %p147
      %p150 = scmp.ne.s32.totalorder %s133, %s149
      %p151 = scmp.eq.s32.totalorder %s24, 0
      %p152 = por %p150, %p151
      %p153 = scmp.le.s32.totalorder 1, %s18
      %p154 = scmp.lt.s32.totalorder %s18, 9
      %p155 = pnand %p153, %p154
      %p156 = pneg %p155
      // Predicated region
      $region9: #{tpu_custom_call.1} parent=5 // pred_check
        _
      $region10: #{tpu_custom_call.1} parent=5 // pred_check_branch
        %158 = sbr.rel (%p155) target = $region12
      $region11: #{tpu_custom_call.1} parent=5 // pred_region
        %s159 = ssub.s32 %s18, 1
        // Predicated region
        $region13: #{tpu_custom_call.1} parent=11 // pred_check
          %p160 = pneg %p77
        $region14: #{tpu_custom_call.1} parent=11 // pred_check_branch
          %162 = sbr.rel (%p160) target = $region16
        $region15: #{tpu_custom_call.1} parent=11 // pred_region
          %s164 = ssub.s32 16, 16
          %165 = vsyncadd [#allocation11], %s164
          %s167 = sshll.u32 [#allocation10], 4
          %s168 = int_to_ptr.vmem [resolvable:$true] %s167
          %170 = dma.hbm_to_vmem [thread:$0]  %s1, 16, %s168, [#allocation11]
        $region16: #{tpu_custom_call.1} parent=11 // pred_fallthru
          _
        // Predicated region
        $region17: #{tpu_custom_call.1} parent=11 // pred_check
          %p171 = pneg %p98
        $region18: #{tpu_custom_call.1} parent=11 // pred_check_branch
          %173 = sbr.rel (%p171) target = $region20
        $region19: #{tpu_custom_call.1} parent=11 // pred_region
          _
        $region20: #{tpu_custom_call.1} parent=11 // pred_fallthru
          _
        // Predicated region
        $region21: #{tpu_custom_call.1} parent=11 // pred_check
          %p174 = pneg %p119
        $region22: #{tpu_custom_call.1} parent=11 // pred_check_branch
          %176 = sbr.rel (%p174) target = $region24
        $region23: #{tpu_custom_call.1} parent=11 // pred_region
          %s178 = ssub.s32 32, 32
          %179 = vsyncadd [#allocation11], %s178
          %s181 = sshll.u32 [#allocation12], 4
          %s182 = int_to_ptr.vmem [resolvable:$true] %s181
          %184 = dma.hbm_to_vmem [thread:$0]  %s4, 32, %s182, [#allocation11]
        $region24: #{tpu_custom_call.1} parent=11 // pred_fallthru
          _
      $region12: #{tpu_custom_call.1} parent=5 // pred_fallthru
        _
      %p185 = scmp.lt.s32.totalorder %s18, 8
      // Predicated region
      $region25: #{tpu_custom_call.1} parent=5 // pred_check
        %p186 = pneg %p185
      $region26: #{tpu_custom_call.1} parent=5 // pred_check_branch
        %188 = sbr.rel (%p186) target = $region28
      $region27: #{tpu_custom_call.1} parent=5 // pred_region
        // Predicated region
        $region29: #{tpu_custom_call.1} parent=27 // pred_check
          %p189 = pneg %p50
        $region30: #{tpu_custom_call.1} parent=27 // pred_check_branch
          %191 = sbr.rel (%p189) target = $region32
        $region31: #{tpu_custom_call.1} parent=27 // pred_region
          %s192 = sand.u32 %s40, 1
          %s193 = scalar_lea.sflag [#allocation8], %s192
          %s194 = sand.u32 %s40, 1
          %s195 = smul.addr %s194, 128
          %s196 = scalar_lea.vmem [#allocation7], %s195
          %s197 = smul.u32 4, %s26
          %s199 = ssub.s32 2048, 2048
          %200 = vsyncadd %s193, %s199
          %s201 = smul.addr %s197, 64
          %s202 = scalar_lea.hbm %s0, %s201
          %s203 = sshll.u32 %s196, 4
          %s204 = int_to_ptr.vmem [resolvable:$true] %s203
          %209 = dma.hbm_to_vmem [thread:$0]  %s202, 2048, %s204, %s193, 512, 256, 16
        $region32: #{tpu_custom_call.1} parent=27 // pred_fallthru
          _
      $region28: #{tpu_custom_call.1} parent=5 // pred_fallthru
        _
      %p210 = scmp.le.s32.totalorder 1, %s18
      %p211 = scmp.lt.s32.totalorder %s18, 9
      %p212 = pnand %p210, %p211
      %p213 = pneg %p212
      // Predicated region
      $region33: #{tpu_custom_call.1} parent=5 // pred_check
        _
      $region34: #{tpu_custom_call.1} parent=5 // pred_check_branch
        %215 = sbr.rel (%p212) target = $region36
      $region35: #{tpu_custom_call.1} parent=5 // pred_region
        %s216 = ssub.s32 %s18, 1
        %s217 = sand.u32 %s43, 1
        %s218 = scalar_lea.sflag [#allocation8], %s217
        %s219 = sand.u32 %s43, 1
        %s220 = smul.addr %s219, 128
        %s221 = scalar_lea.vmem [#allocation7], %s220
        // Predicated region
        $region37: #{tpu_custom_call.1} parent=35 // pred_check
          %p222 = pneg %p56
        $region38: #{tpu_custom_call.1} parent=35 // pred_check_branch
          %224 = sbr.rel (%p222) target = $region40
        $region39: #{tpu_custom_call.1} parent=35 // pred_region
          %225 = dma.done %s218, 2048
        $region40: #{tpu_custom_call.1} parent=35 // pred_fallthru
          _
        // Predicated region
        $region41: #{tpu_custom_call.1} parent=35 // pred_check
          %p226 = pneg %p77
        $region42: #{tpu_custom_call.1} parent=35 // pred_check_branch
          %228 = sbr.rel (%p226) target = $region44
        $region43: #{tpu_custom_call.1} parent=35 // pred_region
          %229 = dma.done [#allocation11], 16
        $region44: #{tpu_custom_call.1} parent=35 // pred_fallthru
          _
        // Predicated region
        $region45: #{tpu_custom_call.1} parent=35 // pred_check
          %p230 = pneg %p119
        $region46: #{tpu_custom_call.1} parent=35 // pred_check_branch
          %232 = sbr.rel (%p230) target = $region48
        $region47: #{tpu_custom_call.1} parent=35 // pred_region
          %233 = dma.done [#allocation11], 32
        $region48: #{tpu_custom_call.1} parent=35 // pred_fallthru
          _
        %s234 = sand.u32 %s43, 1
        %s235 = scalar_lea.sflag [#allocation8], %s234
        %s236 = sand.u32 %s43, 1
        %s237 = smul.addr %s236, 128
        %s238 = scalar_lea.vmem [#allocation7], %s237
        %p239 = pneg %p56
        %p240 = pneg %p53
        %p241 = pneg %p77
        %p242 = pneg %p74
        %p243 = pneg %p98
        %p244 = pneg %p95
        %p245 = pneg %p119
        %p246 = pneg %p116
        %p247 = pneg %p145
        %p248 = pneg %p142
        %s249 = sand.u32 %s132, 1
        %s250 = scalar_lea.sflag [#allocation9], %s249
        %s251 = sand.u32 %s132, 1
        %s252 = smul.addr %s251, 8
        %s253 = scalar_lea.vmem [#allocation13], %s252
        %s254 = smul.u32 4, %s28
        %s255 = smul.u32 4, %s28
        %s257 = smul.u32 %s28, 512
        %p258 = scmp.eq.s32.totalorder %s27, 0
        %p259 = scmp.eq.s32.totalorder %s28, 0
        %p260 = pnand %p258, %p259
        %p261 = pneg %p260
        // Predicated region
        $region49: #{tpu_custom_call.1} parent=35 // pred_check
          _
        $region50: #{tpu_custom_call.1} parent=35 // pred_check_branch
          %263 = sbr.rel (%p260) target = $region52
        $region51: #{tpu_custom_call.1} parent=35 // pred_region
          #allocation15 [shape = 'u32[9]{0}', space=smem, size = 0x24, scoped, tag = 'DMA stride descriptor']
          %s265 = sshll.u32 1, 14
          %s266 = sxor.u32 4294967295, %s265
          %s268 = sld [smem:[#allocation0]]
          %s269 = sadd.s32 2, %s268
          %s271 = sshll.u32 7, 26
          %s272 = sxor.u32 4294967295, %s271
          %s273 = sand.u32 0, %s272
          %s274 = sshll.u32 %s269, 26
          %s275 = sor.u32 %s273, %s274
          %s276 = sshll.u32 [#allocation2], 4
          %s277 = int_to_ptr.vmem [resolvable:$true] %s276
          %280 = sst [smem:[#allocation15]] 1024
          %s281 = scalar_lea.smem [#allocation15], 1
          %282 = sst [smem:[%s281]] 1024
          %s283 = scalar_lea.smem [#allocation15], 2
          %284 = sst [smem:[%s283]] 8
          %s285 = scalar_lea.smem [#allocation15], 3
          %286 = sst [smem:[%s285]] 64
          %s287 = scalar_lea.smem [#allocation15], 4
          %288 = sst [smem:[%s287]] 128
          %s289 = scalar_lea.smem [#allocation15], 5
          %290 = sst [smem:[%s289]] 2
          %s291 = scalar_lea.smem [#allocation15], 6
          %292 = sst [smem:[%s291]] 512
          %s293 = scalar_lea.smem [#allocation15], 7
          %294 = sst [smem:[%s293]] 64
          %s295 = scalar_lea.smem [#allocation15], 8
          %296 = sst [smem:[%s295]] 4
          %298 = dma.general %s3, 65536, %s277, [#allocation6], [#allocation14], [#allocation15], %s275, 0
        $region52: #{tpu_custom_call.1} parent=35 // pred_fallthru
          _
        // Predicated region
        $region53: #{tpu_custom_call.1} parent=35 // pred_check
          %p299 = pneg %p258
        $region54: #{tpu_custom_call.1} parent=35 // pred_check_branch
          %301 = sbr.rel (%p299) target = $region56
        $region55: #{tpu_custom_call.1} parent=35 // pred_region
          %v302 = vld [vmem:[#allocation10] sm:$0x1]
          %v303 = vld [vmem:[%s221] sm:$0xff]
          %v304 = vld [vmem:[%s221 + $0x8] sm:$0xff]
          %v305 = vld [vmem:[%s221 + $0x10] sm:$0xff]
          %v306 = vld [vmem:[%s221 + $0x18] sm:$0xff]
          %v307 = vld [vmem:[%s221 + $0x20] sm:$0xff]
          %v308 = vld [vmem:[%s221 + $0x28] sm:$0xff]
          %v309 = vld [vmem:[%s221 + $0x30] sm:$0xff]
          %v310 = vld [vmem:[%s221 + $0x38] sm:$0xff]
          %v311 = vld [vmem:[%s221 + $0x40] sm:$0xff]
          %v312 = vld [vmem:[%s221 + $0x48] sm:$0xff]
          %v313 = vld [vmem:[%s221 + $0x50] sm:$0xff]
          %v314 = vld [vmem:[%s221 + $0x58] sm:$0xff]
          %v315 = vld [vmem:[%s221 + $0x60] sm:$0xff]
          %v316 = vld [vmem:[%s221 + $0x68] sm:$0xff]
          %v317 = vld [vmem:[%s221 + $0x70] sm:$0xff]
          %v318 = vld [vmem:[%s221 + $0x78] sm:$0xff]
          %v319 = vld [vmem:[%s2] sm:$0x3]
          %321 = vset.pattern.permute.xlu0 0
          %322 = vperm.xlu0 %321, %v319
          %v323 = vpop.permute.xlu0 %322
          %v341 = vunpack.c.l.b16 %v303
          %v342 = vunpack.c.h.b16 %v303
          %v343 = vunpack.c.l.b16 %v304
          %v344 = vunpack.c.h.b16 %v304
          %v345 = vunpack.c.l.b16 %v305
          %v346 = vunpack.c.h.b16 %v305
          %v347 = vunpack.c.l.b16 %v306
          %v348 = vunpack.c.h.b16 %v306
          %v349 = vunpack.c.l.b16 %v307
          %v350 = vunpack.c.h.b16 %v307
          %v351 = vunpack.c.l.b16 %v308
          %v352 = vunpack.c.h.b16 %v308
          %v353 = vunpack.c.l.b16 %v309
          %v354 = vunpack.c.h.b16 %v309
          %v355 = vunpack.c.l.b16 %v310
          %v356 = vunpack.c.h.b16 %v310
          %v357 = vunpack.c.l.b16 %v311
          %v358 = vunpack.c.h.b16 %v311
          %v359 = vunpack.c.l.b16 %v312
          %v360 = vunpack.c.h.b16 %v312
          %v361 = vunpack.c.l.b16 %v313
          %v362 = vunpack.c.h.b16 %v313
          %v363 = vunpack.c.l.b16 %v314
          %v364 = vunpack.c.h.b16 %v314
          %v365 = vunpack.c.l.b16 %v315
          %v366 = vunpack.c.h.b16 %v315
          %v367 = vunpack.c.l.b16 %v316
          %v368 = vunpack.c.h.b16 %v316
          %v369 = vunpack.c.l.b16 %v317
          %v370 = vunpack.c.h.b16 %v317
          %v371 = vunpack.c.l.b16 %v318
          %v372 = vunpack.c.h.b16 %v318
          %v373 = vpack.c.b16 %v345, %v341
          %v374 = vpack.c.b16 %v346, %v342
          %v375 = vpack.c.b16 %v347, %v343
          %v376 = vpack.c.b16 %v348, %v344
          %v377 = vpack.c.b16 %v353, %v349
          %v378 = vpack.c.b16 %v354, %v350
          %v379 = vpack.c.b16 %v355, %v351
          %v380 = vpack.c.b16 %v356, %v352
          %v381 = vpack.c.b16 %v361, %v357
          %v382 = vpack.c.b16 %v362, %v358
          %v383 = vpack.c.b16 %v363, %v359
          %v384 = vpack.c.b16 %v364, %v360
          %v385 = vpack.c.b16 %v369, %v365
          %v386 = vpack.c.b16 %v370, %v366
          %v387 = vpack.c.b16 %v371, %v367
          %v388 = vpack.c.b16 %v372, %v368
          %vm405 = vcmask 523264
          %v407 = vsel %vm405, %v302, 0
          %409 = vmatprep.subr.bf16.mxu0 %v374
          %410 = vmatpush1.bf16.msra.mxu0 %v373
          %411 = vmatprep.subr.bf16.mxu0 %v378
          %412 = vmatpush1.bf16.msra.mxu0 %v377
          %413 = vmatprep.subr.bf16.mxu0 %v382
          %414 = vmatpush1.bf16.msra.mxu0 %v381
          %415 = vmatprep.subr.bf16.mxu0 %v386
          %416 = vmatpush1.bf16.msra.mxu0 %v385
          %417 = vmatprep.subr.bf16.mxu0 0
          %418 = vmatpush1.bf16.msra.mxu0 0
          %419 = vmatprep.subr.bf16.mxu0 0
          %420 = vmatpush1.bf16.msra.mxu0 0
          %421 = vmatprep.subr.bf16.mxu0 0
          %422 = vmatpush1.bf16.msra.mxu0 0
          %423 = vmatprep.subr.bf16.mxu0 0
          %424 = vmatpush1.bf16.msra.mxu0 0
          %425 = vmatprep.subr.bf16.mxu0 0
          %426 = vmatpush1.bf16.msra.mxu0 0
          %427 = vmatprep.subr.bf16.mxu0 0
          %428 = vmatpush1.bf16.msra.mxu0 0
          %429 = vmatprep.subr.bf16.mxu0 0
          %430 = vmatpush1.bf16.msra.mxu0 0
          %431 = vmatprep.subr.bf16.mxu0 0
          %432 = vmatpush1.bf16.msra.mxu0 0
          %433 = vmatprep.subr.bf16.mxu0 0
          %434 = vmatpush1.bf16.msra.mxu0 0
          %435 = vmatprep.subr.bf16.mxu0 0
          %436 = vmatpush1.bf16.msra.mxu0 0
          %437 = vmatprep.subr.bf16.mxu0 0
          %438 = vmatpush1.bf16.msra.mxu0 0
          %439 = vmatprep.subr.bf16.mxu0 0
          %440 = vmatpush1.bf16.msra.mxu0 0
          %441 = vmatprep.mubr.bf16.mxu0 0
          %442 = vmatmul.mubr.bf16.gmra.mrb[0].mxu0 %v407
          %v443 = vpop.f32.mrb[0].mxu0
          %v444 = vadd.f32 %v323, %v443
          %v445 = vpop.f32.mrb[0].mxu0
          %v446 = vadd.f32 %v323, %v445
          %v447 = vpop.f32.mrb[0].mxu0
          %v448 = vpop.f32.mrb[0].mxu0
          %449 = vdwg.mxu0
          %450 = vmatprep.subr.bf16.mxu0 %v376
          %451 = vmatpush1.bf16.msra.mxu0 %v375
          %452 = vmatprep.subr.bf16.mxu0 %v380
          %453 = vmatpush1.bf16.msra.mxu0 %v379
          %454 = vmatprep.subr.bf16.mxu0 %v384
          %455 = vmatpush1.bf16.msra.mxu0 %v383
          %456 = vmatprep.subr.bf16.mxu0 %v388
          %457 = vmatpush1.bf16.msra.mxu0 %v387
          %458 = vmatprep.subr.bf16.mxu0 0
          %459 = vmatpush1.bf16.msra.mxu0 0
          %460 = vmatprep.subr.bf16.mxu0 0
          %461 = vmatpush1.bf16.msra.mxu0 0
          %462 = vmatprep.subr.bf16.mxu0 0
          %463 = vmatpush1.bf16.msra.mxu0 0
          %464 = vmatprep.subr.bf16.mxu0 0
          %465 = vmatpush1.bf16.msra.mxu0 0
          %466 = vmatprep.subr.bf16.mxu0 0
          %467 = vmatpush1.bf16.msra.mxu0 0
          %468 = vmatprep.subr.bf16.mxu0 0
          %469 = vmatpush1.bf16.msra.mxu0 0
          %470 = vmatprep.subr.bf16.mxu0 0
          %471 = vmatpush1.bf16.msra.mxu0 0
          %472 = vmatprep.subr.bf16.mxu0 0
          %473 = vmatpush1.bf16.msra.mxu0 0
          %474 = vmatprep.subr.bf16.mxu0 0
          %475 = vmatpush1.bf16.msra.mxu0 0
          %476 = vmatprep.subr.bf16.mxu0 0
          %477 = vmatpush1.bf16.msra.mxu0 0
          %478 = vmatprep.subr.bf16.mxu0 0
          %479 = vmatpush1.bf16.msra.mxu0 0
          %480 = vmatprep.subr.bf16.mxu0 0
          %481 = vmatpush1.bf16.msra.mxu0 0
          %482 = vmatprep.mubr.bf16.mxu0 0
          %483 = vmatmul.mubr.bf16.gmra.mrb[0].mxu0 %v407
          %v484 = vpop.f32.mrb[0].mxu0
          %v485 = vadd.f32 %v323, %v484
          %v486 = vpop.f32.mrb[0].mxu0
          %v487 = vadd.f32 %v323, %v486
          %v488 = vpop.f32.mrb[0].mxu0
          %v489 = vpop.f32.mrb[0].mxu0
          %490 = vdwg.mxu0
          %v495 = vcombine.low %v444, %v446
          %v496 = vcombine.low %v485, %v487
          %v498 = vunpack.c.l.s4 1983009808
          %v499 = vunpack.c.0.s8 %v498
          %v500 = vlaneseq
          %v501 = vshrl.u32 %v500, 7
          %v502 = vsub.s32 %v499, %v501
          %v503 = vrot.slane %v495, %v502
          %v505 = vunpack.c.l.s4 1983009808
          %v506 = vunpack.c.0.s8 %v505
          %v507 = vlaneseq
          %v508 = vshrl.u32 %v507, 7
          %v509 = vsub.s32 %v506, %v508
          %v510 = vrot.slane %v496, %v509
          %v511 = vcombine.low %v503, %v510
          %s513 = sshra.s32 %s257, 7
          %s514 = sand.u32 %s257, 127
          %s515 = smul.addr %s513, 2
          %s516 = scalar_lea.vmem [#allocation3], %s515
          %517 = vst [vmem:[%s516] sm:$0xff] %v511
          %s518 = smul.addr %s513, 2
          %s519 = scalar_lea.vmem [#allocation4], %s518
          %520 = vst [vmem:[%s519] sm:$0xff] %v511
        $region56: #{tpu_custom_call.1} parent=35 // pred_fallthru
          _
        %p521 = scmp.gt.s32.totalorder %s27, 0
        // Predicated region
        $region57: #{tpu_custom_call.1} parent=35 // pred_check
          %p522 = pneg %p521
        $region58: #{tpu_custom_call.1} parent=35 // pred_check_branch
          %524 = sbr.rel (%p522) target = $region60
        $region59: #{tpu_custom_call.1} parent=35 // pred_region
          %p525 = scmp.eq.s32.totalorder %s27, 1
          %p526 = pnand %p525, %p259
          %p527 = pneg %p526
          // Predicated region
          $region61: #{tpu_custom_call.1} parent=59 // pred_check
            _
          $region62: #{tpu_custom_call.1} parent=59 // pred_check_branch
            %529 = sbr.rel (%p526) target = $region64
          $region63: #{tpu_custom_call.1} parent=59 // pred_region
            %s530 = smul.u32 4, 128
            %s531 = smul.u32 %s530, 8
            %s532 = sshll.u32 %s531, 4
            %533 = dma.done [#allocation6], %s532
          $region64: #{tpu_custom_call.1} parent=59 // pred_fallthru
            _
          // Predicated region
          $region65: #{tpu_custom_call.1} parent=59 // pred_check
            %p534 = pneg %p259
          $region66: #{tpu_custom_call.1} parent=59 // pred_check_branch
            %536 = sbr.rel (%p534) target = $region68
          $region67: #{tpu_custom_call.1} parent=59 // pred_region
            %v537 = vld [vmem:[#allocation4] sm:$0xff]
            %v538 = vld [vmem:[#allocation4 + $0x8] sm:$0xff]
            %v541 = vrot.slane %v537, 7
            %v542 = vrot.slane %v541, 2
            %v543 = vrot.slane %v538, 7
            %v544 = vrot.slane %v543, 2
            %v547 = vmax.f32 %v537, %v542
            %v548 = vmax.f32 %v538, %v544
            %v551 = vlaneseq
            %v552 = vshrl.u32 %v551, 7
            %v553 = vsub.s32 0, %v552
            %v554 = vrot.slane %v547, %v553
            %v555 = vlaneseq
            %v556 = vshrl.u32 %v555, 7
            %v557 = vsub.s32 2, %v556
            %v558 = vrot.slane %v547, %v557
            %v559 = vlaneseq
            %v560 = vshrl.u32 %v559, 7
            %v561 = vsub.s32 4, %v560
            %v562 = vrot.slane %v547, %v561
            %v563 = vlaneseq
            %v564 = vshrl.u32 %v563, 7
            %v565 = vsub.s32 6, %v564
            %v566 = vrot.slane %v547, %v565
            %v567 = vlaneseq
            %v568 = vshrl.u32 %v567, 7
            %v569 = vsub.s32 0, %v568
            %v570 = vrot.slane %v548, %v569
            %v571 = vlaneseq
            %v572 = vshrl.u32 %v571, 7
            %v573 = vsub.s32 2, %v572
            %v574 = vrot.slane %v548, %v573
            %v575 = vlaneseq
            %v576 = vshrl.u32 %v575, 7
            %v577 = vsub.s32 4, %v576
            %v578 = vrot.slane %v548, %v577
            %v579 = vlaneseq
            %v580 = vshrl.u32 %v579, 7
            %v581 = vsub.s32 6, %v580
            %v582 = vrot.slane %v548, %v581
            %v591 = vlaneseq
            %v592 = vshrl.u32 %v591, 7
            %v593 = vsub.s32 0, %v592
            %v594 = vrot.slane %v554, %v593
            %v595 = vlaneseq
            %v596 = vshrl.u32 %v595, 7
            %v597 = vsub.s32 0, %v596
            %v598 = vrot.slane %v558, %v597
            %v599 = vlaneseq
            %v600 = vshrl.u32 %v599, 7
            %v601 = vsub.s32 0, %v600
            %v602 = vrot.slane %v562, %v601
            %v603 = vlaneseq
            %v604 = vshrl.u32 %v603, 7
            %v605 = vsub.s32 0, %v604
            %v606 = vrot.slane %v566, %v605
            %v607 = vlaneseq
            %v608 = vshrl.u32 %v607, 7
            %v609 = vsub.s32 0, %v608
            %v610 = vrot.slane %v570, %v609
            %v611 = vlaneseq
            %v612 = vshrl.u32 %v611, 7
            %v613 = vsub.s32 0, %v612
            %v614 = vrot.slane %v574, %v613
            %v615 = vlaneseq
            %v616 = vshrl.u32 %v615, 7
            %v617 = vsub.s32 0, %v616
            %v618 = vrot.slane %v578, %v617
            %v619 = vlaneseq
            %v620 = vshrl.u32 %v619, 7
            %v621 = vsub.s32 0, %v620
            %v622 = vrot.slane %v582, %v621
            %v631 = vcombine.low %v594, %v598
            %v632 = vcombine.low %v602, %v606
            %v634 = vunpack.c.l.s4 1983009808
            %v635 = vunpack.c.0.s8 %v634
            %v636 = vlaneseq
            %v637 = vshrl.u32 %v636, 7
            %v638 = vsub.s32 %v635, %v637
            %v639 = vrot.slane %v631, %v638
            %v641 = vunpack.c.l.s4 1983009808
            %v642 = vunpack.c.0.s8 %v641
            %v643 = vlaneseq
            %v644 = vshrl.u32 %v643, 7
            %v645 = vsub.s32 %v642, %v644
            %v646 = vrot.slane %v632, %v645
            %v647 = vcombine.low %v639, %v646
            %v648 = vcombine.low %v610, %v614
            %v649 = vcombine.low %v618, %v622
            %v651 = vunpack.c.l.s4 1983009808
            %v652 = vunpack.c.0.s8 %v651
            %v653 = vlaneseq
            %v654 = vshrl.u32 %v653, 7
            %v655 = vsub.s32 %v652, %v654
            %v656 = vrot.slane %v648, %v655
            %v658 = vunpack.c.l.s4 1983009808
            %v659 = vunpack.c.0.s8 %v658
            %v660 = vlaneseq
            %v661 = vshrl.u32 %v660, 7
            %v662 = vsub.s32 %v659, %v661
            %v663 = vrot.slane %v649, %v662
            %v664 = vcombine.low %v656, %v663
            %v667 = vsub.f32 %v537, %v647
            %v668 = vsub.f32 %v538, %v664
            %v669 = vmul.f32 %v667, 1.442695
            %v670 = vpow.pop %v669
            %v671 = vmul.f32 %v668, 1.442695
            %v672 = vpow.pop %v671
            %v675 = vrot.slane %v670, 7
            %v676 = vrot.slane %v675, 2
            %v677 = vrot.slane %v672, 7
            %v678 = vrot.slane %v677, 2
            %v681 = vadd.f32 %v670, %v676
            %v682 = vadd.f32 %v672, %v678
            %v683 = vrcp.pop %v681
            %v684 = vrcp.pop %v682
            %v687 = vlaneseq
            %v688 = vshrl.u32 %v687, 7
            %v689 = vsub.s32 0, %v688
            %v690 = vrot.slane %v683, %v689
            %v691 = vlaneseq
            %v692 = vshrl.u32 %v691, 7
            %v693 = vsub.s32 2, %v692
            %v694 = vrot.slane %v683, %v693
            %v695 = vlaneseq
            %v696 = vshrl.u32 %v695, 7
            %v697 = vsub.s32 4, %v696
            %v698 = vrot.slane %v683, %v697
            %v699 = vlaneseq
            %v700 = vshrl.u32 %v699, 7
            %v701 = vsub.s32 6, %v700
            %v702 = vrot.slane %v683, %v701
            %v703 = vlaneseq
            %v704 = vshrl.u32 %v703, 7
            %v705 = vsub.s32 0, %v704
            %v706 = vrot.slane %v684, %v705
            %v707 = vlaneseq
            %v708 = vshrl.u32 %v707, 7
            %v709 = vsub.s32 2, %v708
            %v710 = vrot.slane %v684, %v709
            %v711 = vlaneseq
            %v712 = vshrl.u32 %v711, 7
            %v713 = vsub.s32 4, %v712
            %v714 = vrot.slane %v684, %v713
            %v715 = vlaneseq
            %v716 = vshrl.u32 %v715, 7
            %v717 = vsub.s32 6, %v716
            %v718 = vrot.slane %v684, %v717
            %v727 = vlaneseq
            %v728 = vshrl.u32 %v727, 7
            %v729 = vsub.s32 0, %v728
            %v730 = vrot.slane %v690, %v729
            %v731 = vlaneseq
            %v732 = vshrl.u32 %v731, 7
            %v733 = vsub.s32 0, %v732
            %v734 = vrot.slane %v694, %v733
            %v735 = vlaneseq
            %v736 = vshrl.u32 %v735, 7
            %v737 = vsub.s32 0, %v736
            %v738 = vrot.slane %v698, %v737
            %v739 = vlaneseq
            %v740 = vshrl.u32 %v739, 7
            %v741 = vsub.s32 0, %v740
            %v742 = vrot.slane %v702, %v741
            %v743 = vlaneseq
            %v744 = vshrl.u32 %v743, 7
            %v745 = vsub.s32 0, %v744
            %v746 = vrot.slane %v706, %v745
            %v747 = vlaneseq
            %v748 = vshrl.u32 %v747, 7
            %v749 = vsub.s32 0, %v748
            %v750 = vrot.slane %v710, %v749
            %v751 = vlaneseq
            %v752 = vshrl.u32 %v751, 7
            %v753 = vsub.s32 0, %v752
            %v754 = vrot.slane %v714, %v753
            %v755 = vlaneseq
            %v756 = vshrl.u32 %v755, 7
            %v757 = vsub.s32 0, %v756
            %v758 = vrot.slane %v718, %v757
            %v767 = vcombine.low %v730, %v734
            %v768 = vcombine.low %v738, %v742
            %v770 = vunpack.c.l.s4 1983009808
            %v771 = vunpack.c.0.s8 %v770
            %v772 = vlaneseq
            %v773 = vshrl.u32 %v772, 7
            %v774 = vsub.s32 %v771, %v773
            %v775 = vrot.slane %v767, %v774
            %v777 = vunpack.c.l.s4 1983009808
            %v778 = vunpack.c.0.s8 %v777
            %v779 = vlaneseq
            %v780 = vshrl.u32 %v779, 7
            %v781 = vsub.s32 %v778, %v780
            %v782 = vrot.slane %v768, %v781
            %v783 = vcombine.low %v775, %v782
            %v784 = vcombine.low %v746, %v750
            %v785 = vcombine.low %v754, %v758
            %v787 = vunpack.c.l.s4 1983009808
            %v788 = vunpack.c.0.s8 %v787
            %v789 = vlaneseq
            %v790 = vshrl.u32 %v789, 7
            %v791 = vsub.s32 %v788, %v790
            %v792 = vrot.slane %v784, %v791
            %v794 = vunpack.c.l.s4 1983009808
            %v795 = vunpack.c.0.s8 %v794
            %v796 = vlaneseq
            %v797 = vshrl.u32 %v796, 7
            %v798 = vsub.s32 %v795, %v797
            %v799 = vrot.slane %v785, %v798
            %v800 = vcombine.low %v792, %v799
            %v803 = vmul.f32 %v670, %v783
            %v804 = vmul.f32 %v672, %v800
            %v807 = vcombine.high %v803, %v803
            %v809 = vunpack.c.l.s4 1983009808
            %v810 = vunpack.c.0.s8 %v809
            %v811 = vlaneseq
            %v812 = vshrl.u32 %v811, 7
            %v813 = vsub.s32 %v810, %v812
            %v814 = vrot.slane %v803, %v813
            %v816 = vunpack.c.l.s4 1983009808
            %v817 = vunpack.c.0.s8 %v816
            %v818 = vlaneseq
            %v819 = vshrl.u32 %v818, 7
            %v820 = vsub.s32 %v817, %v819
            %v821 = vrot.slane %v807, %v820
            %v822 = vcombine.high %v814, %v814
            %v823 = vcombine.high %v821, %v821
            %v824 = vcombine.high %v804, %v804
            %v826 = vunpack.c.l.s4 1983009808
            %v827 = vunpack.c.0.s8 %v826
            %v828 = vlaneseq
            %v829 = vshrl.u32 %v828, 7
            %v830 = vsub.s32 %v827, %v829
            %v831 = vrot.slane %v804, %v830
            %v833 = vunpack.c.l.s4 1983009808
            %v834 = vunpack.c.0.s8 %v833
            %v835 = vlaneseq
            %v836 = vshrl.u32 %v835, 7
            %v837 = vsub.s32 %v834, %v836
            %v838 = vrot.slane %v824, %v837
            %v839 = vcombine.high %v831, %v831
            %v840 = vcombine.high %v838, %v838
            %v849 = vpack.c.bf16 %v814, %v814
            %v850 = vpack.c.bf16 %v822, %v822
            %v851 = vpack.c.bf16 %v821, %v821
            %v852 = vpack.c.bf16 %v823, %v823
            %v853 = vpack.c.bf16 %v831, %v831
            %v854 = vpack.c.bf16 %v839, %v839
            %v855 = vpack.c.bf16 %v838, %v838
            %v856 = vpack.c.bf16 %v840, %v840
            %v865 = vcombine.low %v849, %v850
            %v866 = vcombine.low %v851, %v852
            %v867 = vcombine.low %v853, %v854
            %v868 = vcombine.low %v855, %v856
            %v870 = vunpack.c.l.s4 1966171168
            %v871 = vunpack.c.0.s8 %v870
            %v872 = vlaneseq
            %v873 = vshrl.u32 %v872, 7
            %v874 = vsub.s32 %v871, %v873
            %v875 = vrot.slane %v865, %v874
            %v877 = vunpack.c.l.s4 1966171168
            %v878 = vunpack.c.0.s8 %v877
            %v879 = vlaneseq
            %v880 = vshrl.u32 %v879, 7
            %v881 = vsub.s32 %v878, %v880
            %v882 = vrot.slane %v866, %v881
            %v884 = vunpack.c.l.s4 1966171168
            %v885 = vunpack.c.0.s8 %v884
            %v886 = vlaneseq
            %v887 = vshrl.u32 %v886, 7
            %v888 = vsub.s32 %v885, %v887
            %v889 = vrot.slane %v867, %v888
            %v891 = vunpack.c.l.s4 1966171168
            %v892 = vunpack.c.0.s8 %v891
            %v893 = vlaneseq
            %v894 = vshrl.u32 %v893, 7
            %v895 = vsub.s32 %v892, %v894
            %v896 = vrot.slane %v868, %v895
            %v897 = vcombine.low %v875, %v882
            %v898 = vcombine.low %v889, %v896
            %v900 = vunpack.c.l.s4 1966171168
            %v901 = vunpack.c.0.s8 %v900
            %v902 = vlaneseq
            %v903 = vshrl.u32 %v902, 7
            %v904 = vsub.s32 %v901, %v903
            %v905 = vrot.slane %v897, %v904
            %v907 = vunpack.c.l.s4 1966171168
            %v908 = vunpack.c.0.s8 %v907
            %v909 = vlaneseq
            %v910 = vshrl.u32 %v909, 7
            %v911 = vsub.s32 %v908, %v910
            %v912 = vrot.slane %v898, %v911
            %v913 = vcombine.low %v905, %v912
            %915 = vst [vmem:[#allocation5] sm:$0xff] %v913
          $region68: #{tpu_custom_call.1} parent=59 // pred_fallthru
            _
          %v916 = vld [vmem:[#allocation5] sm:$0xff]
          %s917 = sshra.s32 %s257, 7
          %s918 = sand.u32 %s257, 127
          %s919 = smul.addr %s917, 8
          %s920 = scalar_lea.vmem [#allocation2], %s919
          %v921 = vld [vmem:[%s920] sm:$0xff]
          %v922 = vld [vmem:[%s920 + $0x8] sm:$0xff]
          %v923 = vld [vmem:[%s920 + $0x10] sm:$0xff]
          %v924 = vld [vmem:[%s920 + $0x18] sm:$0xff]
          %v925 = vld [vmem:[%s920 + $0x40] sm:$0xff]
          %v926 = vld [vmem:[%s920 + $0x48] sm:$0xff]
          %v927 = vld [vmem:[%s920 + $0x50] sm:$0xff]
          %v928 = vld [vmem:[%s920 + $0x58] sm:$0xff]
          %v929 = vld [vmem:[%s920 + $0x80] sm:$0xff]
          %v930 = vld [vmem:[%s920 + $0x88] sm:$0xff]
          %v931 = vld [vmem:[%s920 + $0x90] sm:$0xff]
          %v932 = vld [vmem:[%s920 + $0x98] sm:$0xff]
          %v933 = vld [vmem:[%s920 + $0xc0] sm:$0xff]
          %v934 = vld [vmem:[%s920 + $0xc8] sm:$0xff]
          %v935 = vld [vmem:[%s920 + $0xd0] sm:$0xff]
          %v936 = vld [vmem:[%s920 + $0xd8] sm:$0xff]
          %v937 = vld [vmem:[%s920 + $0x100] sm:$0xff]
          %v938 = vld [vmem:[%s920 + $0x108] sm:$0xff]
          %v939 = vld [vmem:[%s920 + $0x110] sm:$0xff]
          %v940 = vld [vmem:[%s920 + $0x118] sm:$0xff]
          %v941 = vld [vmem:[%s920 + $0x140] sm:$0xff]
          %v942 = vld [vmem:[%s920 + $0x148] sm:$0xff]
          %v943 = vld [vmem:[%s920 + $0x150] sm:$0xff]
          %v944 = vld [vmem:[%s920 + $0x158] sm:$0xff]
          %v945 = vld [vmem:[%s920 + $0x180] sm:$0xff]
          %v946 = vld [vmem:[%s920 + $0x188] sm:$0xff]
          %v947 = vld [vmem:[%s920 + $0x190] sm:$0xff]
          %v948 = vld [vmem:[%s920 + $0x198] sm:$0xff]
          %v949 = vld [vmem:[%s920 + $0x1c0] sm:$0xff]
          %v950 = vld [vmem:[%s920 + $0x1c8] sm:$0xff]
          %v951 = vld [vmem:[%s920 + $0x1d0] sm:$0xff]
          %v952 = vld [vmem:[%s920 + $0x1d8] sm:$0xff]
          %v953 = vld [vmem:[%s920 + $0x200] sm:$0xff]
          %v954 = vld [vmem:[%s920 + $0x208] sm:$0xff]
          %v955 = vld [vmem:[%s920 + $0x210] sm:$0xff]
          %v956 = vld [vmem:[%s920 + $0x218] sm:$0xff]
          %v957 = vld [vmem:[%s920 + $0x240] sm:$0xff]
          %v958 = vld [vmem:[%s920 + $0x248] sm:$0xff]
          %v959 = vld [vmem:[%s920 + $0x250] sm:$0xff]
          %v960 = vld [vmem:[%s920 + $0x258] sm:$0xff]
          %v961 = vld [vmem:[%s920 + $0x280] sm:$0xff]
          %v962 = vld [vmem:[%s920 + $0x288] sm:$0xff]
          %v963 = vld [vmem:[%s920 + $0x290] sm:$0xff]
          %v964 = vld [vmem:[%s920 + $0x298] sm:$0xff]
          %v965 = vld [vmem:[%s920 + $0x2c0] sm:$0xff]
          %v966 = vld [vmem:[%s920 + $0x2c8] sm:$0xff]
          %v967 = vld [vmem:[%s920 + $0x2d0] sm:$0xff]
          %v968 = vld [vmem:[%s920 + $0x2d8] sm:$0xff]
          %v969 = vld [vmem:[%s920 + $0x300] sm:$0xff]
          %v970 = vld [vmem:[%s920 + $0x308] sm:$0xff]
          %v971 = vld [vmem:[%s920 + $0x310] sm:$0xff]
          %v972 = vld [vmem:[%s920 + $0x318] sm:$0xff]
          %v973 = vld [vmem:[%s920 + $0x340] sm:$0xff]
          %v974 = vld [vmem:[%s920 + $0x348] sm:$0xff]
          %v975 = vld [vmem:[%s920 + $0x350] sm:$0xff]
          %v976 = vld [vmem:[%s920 + $0x358] sm:$0xff]
          %v977 = vld [vmem:[%s920 + $0x380] sm:$0xff]
          %v978 = vld [vmem:[%s920 + $0x388] sm:$0xff]
          %v979 = vld [vmem:[%s920 + $0x390] sm:$0xff]
          %v980 = vld [vmem:[%s920 + $0x398] sm:$0xff]
          %v981 = vld [vmem:[%s920 + $0x3c0] sm:$0xff]
          %v982 = vld [vmem:[%s920 + $0x3c8] sm:$0xff]
          %v983 = vld [vmem:[%s920 + $0x3d0] sm:$0xff]
          %v984 = vld [vmem:[%s920 + $0x3d8] sm:$0xff]
          %v985 = vld [vmem:[%s920 + $0x400] sm:$0xff]
          %v986 = vld [vmem:[%s920 + $0x408] sm:$0xff]
          %v987 = vld [vmem:[%s920 + $0x410] sm:$0xff]
          %v988 = vld [vmem:[%s920 + $0x418] sm:$0xff]
          %v989 = vld [vmem:[%s920 + $0x440] sm:$0xff]
          %v990 = vld [vmem:[%s920 + $0x448] sm:$0xff]
          %v991 = vld [vmem:[%s920 + $0x450] sm:$0xff]
          %v992 = vld [vmem:[%s920 + $0x458] sm:$0xff]
          %v993 = vld [vmem:[%s920 + $0x480] sm:$0xff]
          %v994 = vld [vmem:[%s920 + $0x488] sm:$0xff]
          %v995 = vld [vmem:[%s920 + $0x490] sm:$0xff]
          %v996 = vld [vmem:[%s920 + $0x498] sm:$0xff]
          %v997 = vld [vmem:[%s920 + $0x4c0] sm:$0xff]
          %v998 = vld [vmem:[%s920 + $0x4c8] sm:$0xff]
          %v999 = vld [vmem:[%s920 + $0x4d0] sm:$0xff]
          %v1000 = vld [vmem:[%s920 + $0x4d8] sm:$0xff]
          %v1001 = vld [vmem:[%s920 + $0x500] sm:$0xff]
          %v1002 = vld [vmem:[%s920 + $0x508] sm:$0xff]
          %v1003 = vld [vmem:[%s920 + $0x510] sm:$0xff]
          %v1004 = vld [vmem:[%s920 + $0x518] sm:$0xff]
          %v1005 = vld [vmem:[%s920 + $0x540] sm:$0xff]
          %v1006 = vld [vmem:[%s920 + $0x548] sm:$0xff]
          %v1007 = vld [vmem:[%s920 + $0x550] sm:$0xff]
          %v1008 = vld [vmem:[%s920 + $0x558] sm:$0xff]
          %v1009 = vld [vmem:[%s920 + $0x580] sm:$0xff]
          %v1010 = vld [vmem:[%s920 + $0x588] sm:$0xff]
          %v1011 = vld [vmem:[%s920 + $0x590] sm:$0xff]
          %v1012 = vld [vmem:[%s920 + $0x598] sm:$0xff]
          %v1013 = vld [vmem:[%s920 + $0x5c0] sm:$0xff]
          %v1014 = vld [vmem:[%s920 + $0x5c8] sm:$0xff]
          %v1015 = vld [vmem:[%s920 + $0x5d0] sm:$0xff]
          %v1016 = vld [vmem:[%s920 + $0x5d8] sm:$0xff]
          %v1017 = vld [vmem:[%s920 + $0x600] sm:$0xff]
          %v1018 = vld [vmem:[%s920 + $0x608] sm:$0xff]
          %v1019 = vld [vmem:[%s920 + $0x610] sm:$0xff]
          %v1020 = vld [vmem:[%s920 + $0x618] sm:$0xff]
          %v1021 = vld [vmem:[%s920 + $0x640] sm:$0xff]
          %v1022 = vld [vmem:[%s920 + $0x648] sm:$0xff]
          %v1023 = vld [vmem:[%s920 + $0x650] sm:$0xff]
          %v1024 = vld [vmem:[%s920 + $0x658] sm:$0xff]
          %v1025 = vld [vmem:[%s920 + $0x680] sm:$0xff]
          %v1026 = vld [vmem:[%s920 + $0x688] sm:$0xff]
          %v1027 = vld [vmem:[%s920 + $0x690] sm:$0xff]
          %v1028 = vld [vmem:[%s920 + $0x698] sm:$0xff]
          %v1029 = vld [vmem:[%s920 + $0x6c0] sm:$0xff]
          %v1030 = vld [vmem:[%s920 + $0x6c8] sm:$0xff]
          %v1031 = vld [vmem:[%s920 + $0x6d0] sm:$0xff]
          %v1032 = vld [vmem:[%s920 + $0x6d8] sm:$0xff]
          %v1033 = vld [vmem:[%s920 + $0x700] sm:$0xff]
          %v1034 = vld [vmem:[%s920 + $0x708] sm:$0xff]
          %v1035 = vld [vmem:[%s920 + $0x710] sm:$0xff]
          %v1036 = vld [vmem:[%s920 + $0x718] sm:$0xff]
          %v1037 = vld [vmem:[%s920 + $0x740] sm:$0xff]
          %v1038 = vld [vmem:[%s920 + $0x748] sm:$0xff]
          %v1039 = vld [vmem:[%s920 + $0x750] sm:$0xff]
          %v1040 = vld [vmem:[%s920 + $0x758] sm:$0xff]
          %v1041 = vld [vmem:[%s920 + $0x780] sm:$0xff]
          %v1042 = vld [vmem:[%s920 + $0x788] sm:$0xff]
          %v1043 = vld [vmem:[%s920 + $0x790] sm:$0xff]
          %v1044 = vld [vmem:[%s920 + $0x798] sm:$0xff]
          %v1045 = vld [vmem:[%s920 + $0x7c0] sm:$0xff]
          %v1046 = vld [vmem:[%s920 + $0x7c8] sm:$0xff]
          %v1047 = vld [vmem:[%s920 + $0x7d0] sm:$0xff]
          %v1048 = vld [vmem:[%s920 + $0x7d8] sm:$0xff]
          %v1049 = vld [vmem:[%s920 + $0x800] sm:$0xff]
          %v1050 = vld [vmem:[%s920 + $0x808] sm:$0xff]
          %v1051 = vld [vmem:[%s920 + $0x810] sm:$0xff]
          %v1052 = vld [vmem:[%s920 + $0x818] sm:$0xff]
          %v1053 = vld [vmem:[%s920 + $0x840] sm:$0xff]
          %v1054 = vld [vmem:[%s920 + $0x848] sm:$0xff]
          %v1055 = vld [vmem:[%s920 + $0x850] sm:$0xff]
          %v1056 = vld [vmem:[%s920 + $0x858] sm:$0xff]
          %v1057 = vld [vmem:[%s920 + $0x880] sm:$0xff]
          %v1058 = vld [vmem:[%s920 + $0x888] sm:$0xff]
          %v1059 = vld [vmem:[%s920 + $0x890] sm:$0xff]
          %v1060 = vld [vmem:[%s920 + $0x898] sm:$0xff]
          %v1061 = vld [vmem:[%s920 + $0x8c0] sm:$0xff]
          %v1062 = vld [vmem:[%s920 + $0x8c8] sm:$0xff]
          %v1063 = vld [vmem:[%s920 + $0x8d0] sm:$0xff]
          %v1064 = vld [vmem:[%s920 + $0x8d8] sm:$0xff]
          %v1065 = vld [vmem:[%s920 + $0x900] sm:$0xff]
          %v1066 = vld [vmem:[%s920 + $0x908] sm:$0xff]
          %v1067 = vld [vmem:[%s920 + $0x910] sm:$0xff]
          %v1068 = vld [vmem:[%s920 + $0x918] sm:$0xff]
          %v1069 = vld [vmem:[%s920 + $0x940] sm:$0xff]
          %v1070 = vld [vmem:[%s920 + $0x948] sm:$0xff]
          %v1071 = vld [vmem:[%s920 + $0x950] sm:$0xff]
          %v1072 = vld [vmem:[%s920 + $0x958] sm:$0xff]
          %v1073 = vld [vmem:[%s920 + $0x980] sm:$0xff]
          %v1074 = vld [vmem:[%s920 + $0x988] sm:$0xff]
          %v1075 = vld [vmem:[%s920 + $0x990] sm:$0xff]
          %v1076 = vld [vmem:[%s920 + $0x998] sm:$0xff]
          %v1077 = vld [vmem:[%s920 + $0x9c0] sm:$0xff]
          %v1078 = vld [vmem:[%s920 + $0x9c8] sm:$0xff]
          %v1079 = vld [vmem:[%s920 + $0x9d0] sm:$0xff]
          %v1080 = vld [vmem:[%s920 + $0x9d8] sm:$0xff]
          %v1081 = vld [vmem:[%s920 + $0xa00] sm:$0xff]
          %v1082 = vld [vmem:[%s920 + $0xa08] sm:$0xff]
          %v1083 = vld [vmem:[%s920 + $0xa10] sm:$0xff]
          %v1084 = vld [vmem:[%s920 + $0xa18] sm:$0xff]
          %v1085 = vld [vmem:[%s920 + $0xa40] sm:$0xff]
          %v1086 = vld [vmem:[%s920 + $0xa48] sm:$0xff]
          %v1087 = vld [vmem:[%s920 + $0xa50] sm:$0xff]
          %v1088 = vld [vmem:[%s920 + $0xa58] sm:$0xff]
          %v1089 = vld [vmem:[%s920 + $0xa80] sm:$0xff]
          %v1090 = vld [vmem:[%s920 + $0xa88] sm:$0xff]
          %v1091 = vld [vmem:[%s920 + $0xa90] sm:$0xff]
          %v1092 = vld [vmem:[%s920 + $0xa98] sm:$0xff]
          %v1093 = vld [vmem:[%s920 + $0xac0] sm:$0xff]
          %v1094 = vld [vmem:[%s920 + $0xac8] sm:$0xff]
          %v1095 = vld [vmem:[%s920 + $0xad0] sm:$0xff]
          %v1096 = vld [vmem:[%s920 + $0xad8] sm:$0xff]
          %v1097 = vld [vmem:[%s920 + $0xb00] sm:$0xff]
          %v1098 = vld [vmem:[%s920 + $0xb08] sm:$0xff]
          %v1099 = vld [vmem:[%s920 + $0xb10] sm:$0xff]
          %v1100 = vld [vmem:[%s920 + $0xb18] sm:$0xff]
          %v1101 = vld [vmem:[%s920 + $0xb40] sm:$0xff]
          %v1102 = vld [vmem:[%s920 + $0xb48] sm:$0xff]
          %v1103 = vld [vmem:[%s920 + $0xb50] sm:$0xff]
          %v1104 = vld [vmem:[%s920 + $0xb58] sm:$0xff]
          %v1105 = vld [vmem:[%s920 + $0xb80] sm:$0xff]
          %v1106 = vld [vmem:[%s920 + $0xb88] sm:$0xff]
          %v1107 = vld [vmem:[%s920 + $0xb90] sm:$0xff]
          %v1108 = vld [vmem:[%s920 + $0xb98] sm:$0xff]
          %v1109 = vld [vmem:[%s920 + $0xbc0] sm:$0xff]
          %v1110 = vld [vmem:[%s920 + $0xbc8] sm:$0xff]
          %v1111 = vld [vmem:[%s920 + $0xbd0] sm:$0xff]
          %v1112 = vld [vmem:[%s920 + $0xbd8] sm:$0xff]
          %v1113 = vld [vmem:[%s920 + $0xc00] sm:$0xff]
          %v1114 = vld [vmem:[%s920 + $0xc08] sm:$0xff]
          %v1115 = vld [vmem:[%s920 + $0xc10] sm:$0xff]
          %v1116 = vld [vmem:[%s920 + $0xc18] sm:$0xff]
          %v1117 = vld [vmem:[%s920 + $0xc40] sm:$0xff]
          %v1118 = vld [vmem:[%s920 + $0xc48] sm:$0xff]
          %v1119 = vld [vmem:[%s920 + $0xc50] sm:$0xff]
          %v1120 = vld [vmem:[%s920 + $0xc58] sm:$0xff]
          %v1121 = vld [vmem:[%s920 + $0xc80] sm:$0xff]
          %v1122 = vld [vmem:[%s920 + $0xc88] sm:$0xff]
          %v1123 = vld [vmem:[%s920 + $0xc90] sm:$0xff]
          %v1124 = vld [vmem:[%s920 + $0xc98] sm:$0xff]
          %v1125 = vld [vmem:[%s920 + $0xcc0] sm:$0xff]
          %v1126 = vld [vmem:[%s920 + $0xcc8] sm:$0xff]
          %v1127 = vld [vmem:[%s920 + $0xcd0] sm:$0xff]
          %v1128 = vld [vmem:[%s920 + $0xcd8] sm:$0xff]
          %v1129 = vld [vmem:[%s920 + $0xd00] sm:$0xff]
          %v1130 = vld [vmem:[%s920 + $0xd08] sm:$0xff]
          %v1131 = vld [vmem:[%s920 + $0xd10] sm:$0xff]
          %v1132 = vld [vmem:[%s920 + $0xd18] sm:$0xff]
          %v1133 = vld [vmem:[%s920 + $0xd40] sm:$0xff]
          %v1134 = vld [vmem:[%s920 + $0xd48] sm:$0xff]
          %v1135 = vld [vmem:[%s920 + $0xd50] sm:$0xff]
          %v1136 = vld [vmem:[%s920 + $0xd58] sm:$0xff]
          %v1137 = vld [vmem:[%s920 + $0xd80] sm:$0xff]
          %v1138 = vld [vmem:[%s920 + $0xd88] sm:$0xff]
          %v1139 = vld [vmem:[%s920 + $0xd90] sm:$0xff]
          %v1140 = vld [vmem:[%s920 + $0xd98] sm:$0xff]
          %v1141 = vld [vmem:[%s920 + $0xdc0] sm:$0xff]
          %v1142 = vld [vmem:[%s920 + $0xdc8] sm:$0xff]
          %v1143 = vld [vmem:[%s920 + $0xdd0] sm:$0xff]
          %v1144 = vld [vmem:[%s920 + $0xdd8] sm:$0xff]
          %v1145 = vld [vmem:[%s920 + $0xe00] sm:$0xff]
          %v1146 = vld [vmem:[%s920 + $0xe08] sm:$0xff]
          %v1147 = vld [vmem:[%s920 + $0xe10] sm:$0xff]
          %v1148 = vld [vmem:[%s920 + $0xe18] sm:$0xff]
          %v1149 = vld [vmem:[%s920 + $0xe40] sm:$0xff]
          %v1150 = vld [vmem:[%s920 + $0xe48] sm:$0xff]
          %v1151 = vld [vmem:[%s920 + $0xe50] sm:$0xff]
          %v1152 = vld [vmem:[%s920 + $0xe58] sm:$0xff]
          %v1153 = vld [vmem:[%s920 + $0xe80] sm:$0xff]
          %v1154 = vld [vmem:[%s920 + $0xe88] sm:$0xff]
          %v1155 = vld [vmem:[%s920 + $0xe90] sm:$0xff]
          %v1156 = vld [vmem:[%s920 + $0xe98] sm:$0xff]
          %v1157 = vld [vmem:[%s920 + $0xec0] sm:$0xff]
          %v1158 = vld [vmem:[%s920 + $0xec8] sm:$0xff]
          %v1159 = vld [vmem:[%s920 + $0xed0] sm:$0xff]
          %v1160 = vld [vmem:[%s920 + $0xed8] sm:$0xff]
          %v1161 = vld [vmem:[%s920 + $0xf00] sm:$0xff]
          %v1162 = vld [vmem:[%s920 + $0xf08] sm:$0xff]
          %v1163 = vld [vmem:[%s920 + $0xf10] sm:$0xff]
          %v1164 = vld [vmem:[%s920 + $0xf18] sm:$0xff]
          %v1165 = vld [vmem:[%s920 + $0xf40] sm:$0xff]
          %v1166 = vld [vmem:[%s920 + $0xf48] sm:$0xff]
          %v1167 = vld [vmem:[%s920 + $0xf50] sm:$0xff]
          %v1168 = vld [vmem:[%s920 + $0xf58] sm:$0xff]
          %v1169 = vld [vmem:[%s920 + $0xf80] sm:$0xff]
          %v1170 = vld [vmem:[%s920 + $0xf88] sm:$0xff]
          %v1171 = vld [vmem:[%s920 + $0xf90] sm:$0xff]
          %v1172 = vld [vmem:[%s920 + $0xf98] sm:$0xff]
          %v1173 = vld [vmem:[%s920 + $0xfc0] sm:$0xff]
          %v1174 = vld [vmem:[%s920 + $0xfc8] sm:$0xff]
          %v1175 = vld [vmem:[%s920 + $0xfd0] sm:$0xff]
          %v1176 = vld [vmem:[%s920 + $0xfd8] sm:$0xff]
          %v1178 = vcombine.high %v916, %v916
          %v1180 = vunpack.c.l.s4 1966171168
          %v1181 = vunpack.c.0.s8 %v1180
          %v1182 = vlaneseq
          %v1183 = vshrl.u32 %v1182, 7
          %v1184 = vsub.s32 %v1181, %v1183
          %v1185 = vrot.slane %v916, %v1184
          %v1187 = vunpack.c.l.s4 1966171168
          %v1188 = vunpack.c.0.s8 %v1187
          %v1189 = vlaneseq
          %v1190 = vshrl.u32 %v1189, 7
          %v1191 = vsub.s32 %v1188, %v1190
          %v1192 = vrot.slane %v1178, %v1191
          %v1193 = vcombine.high %v1185, %v1185
          %v1194 = vcombine.high %v1192, %v1192
          %v1196 = vunpack.c.l.s4 1966171168
          %v1197 = vunpack.c.0.s8 %v1196
          %v1198 = vlaneseq
          %v1199 = vshrl.u32 %v1198, 7
          %v1200 = vsub.s32 %v1197, %v1199
          %v1201 = vrot.slane %v1185, %v1200
          %v1203 = vunpack.c.l.s4 1966171168
          %v1204 = vunpack.c.0.s8 %v1203
          %v1205 = vlaneseq
          %v1206 = vshrl.u32 %v1205, 7
          %v1207 = vsub.s32 %v1204, %v1206
          %v1208 = vrot.slane %v1192, %v1207
          %v1210 = vunpack.c.l.s4 1966171168
          %v1211 = vunpack.c.0.s8 %v1210
          %v1212 = vlaneseq
          %v1213 = vshrl.u32 %v1212, 7
          %v1214 = vsub.s32 %v1211, %v1213
          %v1215 = vrot.slane %v1193, %v1214
          %v1217 = vunpack.c.l.s4 1966171168
          %v1218 = vunpack.c.0.s8 %v1217
          %v1219 = vlaneseq
          %v1220 = vshrl.u32 %v1219, 7
          %v1221 = vsub.s32 %v1218, %v1220
          %v1222 = vrot.slane %v1194, %v1221
          %v1223 = vcombine.high %v1201, %v1201
          %v1224 = vcombine.high %v1208, %v1208
          %v1225 = vcombine.high %v1215, %v1215
          %v1226 = vcombine.high %v1222, %v1222
          %1235 = vmatprep.subr.bf16.mxu0 %v922
          %1236 = vmatpush1.bf16.msra.mxu0 %v921
          %1237 = vmatprep.subr.bf16.mxu0 %v926
          %1238 = vmatpush1.bf16.msra.mxu0 %v925
          %1239 = vmatprep.subr.bf16.mxu0 %v930
          %1240 = vmatpush1.bf16.msra.mxu0 %v929
          %1241 = vmatprep.subr.bf16.mxu0 %v934
          %1242 = vmatpush1.bf16.msra.mxu0 %v933
          %1243 = vmatprep.subr.bf16.mxu0 %v938
          %1244 = vmatpush1.bf16.msra.mxu0 %v937
          %1245 = vmatprep.subr.bf16.mxu0 %v942
          %1246 = vmatpush1.bf16.msra.mxu0 %v941
          %1247 = vmatprep.subr.bf16.mxu0 %v946
          %1248 = vmatpush1.bf16.msra.mxu0 %v945
          %1249 = vmatprep.subr.bf16.mxu0 %v950
          %1250 = vmatpush1.bf16.msra.mxu0 %v949
          %1251 = vmatprep.subr.bf16.mxu0 %v954
          %1252 = vmatpush1.bf16.msra.mxu0 %v953
          %1253 = vmatprep.subr.bf16.mxu0 %v958
          %1254 = vmatpush1.bf16.msra.mxu0 %v957
          %1255 = vmatprep.subr.bf16.mxu0 %v962
          %1256 = vmatpush1.bf16.msra.mxu0 %v961
          %1257 = vmatprep.subr.bf16.mxu0 %v966
          %1258 = vmatpush1.bf16.msra.mxu0 %v965
          %1259 = vmatprep.subr.bf16.mxu0 %v970
          %1260 = vmatpush1.bf16.msra.mxu0 %v969
          %1261 = vmatprep.subr.bf16.mxu0 %v974
          %1262 = vmatpush1.bf16.msra.mxu0 %v973
          %1263 = vmatprep.subr.bf16.mxu0 %v978
          %1264 = vmatpush1.bf16.msra.mxu0 %v977
          %1265 = vmatprep.subr.bf16.mxu0 %v982
          %1266 = vmatpush1.bf16.msra.mxu0 %v981
          %1267 = vmatprep.mubr.bf16.mxu0 %v1215
          %1268 = vmatmul.mubr.bf16.gmra.mrb[0].mxu0 %v1201
          %v1269 = vpop.f32.mrb[0].mxu0
          %v1270 = vadd.f32 0.0, %v1269
          %v1271 = vpop.f32.mrb[0].mxu0
          %v1272 = vadd.f32 0.0, %v1271
          %v1273 = vpop.f32.mrb[0].mxu0
          %v1274 = vpop.f32.mrb[0].mxu0
          %1275 = vdwg.mxu0
          %1276 = vmatprep.subr.bf16.mxu0 %v986
          %1277 = vmatpush1.bf16.msra.mxu0 %v985
          %1278 = vmatprep.subr.bf16.mxu0 %v990
          %1279 = vmatpush1.bf16.msra.mxu0 %v989
          %1280 = vmatprep.subr.bf16.mxu0 %v994
          %1281 = vmatpush1.bf16.msra.mxu0 %v993
          %1282 = vmatprep.subr.bf16.mxu0 %v998
          %1283 = vmatpush1.bf16.msra.mxu0 %v997
          %1284 = vmatprep.subr.bf16.mxu0 %v1002
          %1285 = vmatpush1.bf16.msra.mxu0 %v1001
          %1286 = vmatprep.subr.bf16.mxu0 %v1006
          %1287 = vmatpush1.bf16.msra.mxu0 %v1005
          %1288 = vmatprep.subr.bf16.mxu0 %v1010
          %1289 = vmatpush1.bf16.msra.mxu0 %v1009
          %1290 = vmatprep.subr.bf16.mxu0 %v1014
          %1291 = vmatpush1.bf16.msra.mxu0 %v1013
          %1292 = vmatprep.subr.bf16.mxu0 %v1018
          %1293 = vmatpush1.bf16.msra.mxu0 %v1017
          %1294 = vmatprep.subr.bf16.mxu0 %v1022
          %1295 = vmatpush1.bf16.msra.mxu0 %v1021
          %1296 = vmatprep.subr.bf16.mxu0 %v1026
          %1297 = vmatpush1.bf16.msra.mxu0 %v1025
          %1298 = vmatprep.subr.bf16.mxu0 %v1030
          %1299 = vmatpush1.bf16.msra.mxu0 %v1029
          %1300 = vmatprep.subr.bf16.mxu0 %v1034
          %1301 = vmatpush1.bf16.msra.mxu0 %v1033
          %1302 = vmatprep.subr.bf16.mxu0 %v1038
          %1303 = vmatpush1.bf16.msra.mxu0 %v1037
          %1304 = vmatprep.subr.bf16.mxu0 %v1042
          %1305 = vmatpush1.bf16.msra.mxu0 %v1041
          %1306 = vmatprep.subr.bf16.mxu0 %v1046
          %1307 = vmatpush1.bf16.msra.mxu0 %v1045
          %1308 = vmatprep.mubr.bf16.mxu0 %v1225
          %1309 = vmatmul.mubr.bf16.gmra.mrb[0].mxu0 %v1223
          %v1310 = vpop.f32.mrb[0].mxu0
          %v1311 = vadd.f32 %v1270, %v1310
          %v1312 = vpop.f32.mrb[0].mxu0
          %v1313 = vadd.f32 %v1272, %v1312
          %v1314 = vpop.f32.mrb[0].mxu0
          %v1315 = vpop.f32.mrb[0].mxu0
          %1316 = vdwg.mxu0
          %1317 = vmatprep.subr.bf16.mxu0 %v1050
          %1318 = vmatpush1.bf16.msra.mxu0 %v1049
          %1319 = vmatprep.subr.bf16.mxu0 %v1054
          %1320 = vmatpush1.bf16.msra.mxu0 %v1053
          %1321 = vmatprep.subr.bf16.mxu0 %v1058
          %1322 = vmatpush1.bf16.msra.mxu0 %v1057
          %1323 = vmatprep.subr.bf16.mxu0 %v1062
          %1324 = vmatpush1.bf16.msra.mxu0 %v1061
          %1325 = vmatprep.subr.bf16.mxu0 %v1066
          %1326 = vmatpush1.bf16.msra.mxu0 %v1065
          %1327 = vmatprep.subr.bf16.mxu0 %v1070
          %1328 = vmatpush1.bf16.msra.mxu0 %v1069
          %1329 = vmatprep.subr.bf16.mxu0 %v1074
          %1330 = vmatpush1.bf16.msra.mxu0 %v1073
          %1331 = vmatprep.subr.bf16.mxu0 %v1078
          %1332 = vmatpush1.bf16.msra.mxu0 %v1077
          %1333 = vmatprep.subr.bf16.mxu0 %v1082
          %1334 = vmatpush1.bf16.msra.mxu0 %v1081
          %1335 = vmatprep.subr.bf16.mxu0 %v1086
          %1336 = vmatpush1.bf16.msra.mxu0 %v1085
          %1337 = vmatprep.subr.bf16.mxu0 %v1090
          %1338 = vmatpush1.bf16.msra.mxu0 %v1089
          %1339 = vmatprep.subr.bf16.mxu0 %v1094
          %1340 = vmatpush1.bf16.msra.mxu0 %v1093
          %1341 = vmatprep.subr.bf16.mxu0 %v1098
          %1342 = vmatpush1.bf16.msra.mxu0 %v1097
          %1343 = vmatprep.subr.bf16.mxu0 %v1102
          %1344 = vmatpush1.bf16.msra.mxu0 %v1101
          %1345 = vmatprep.subr.bf16.mxu0 %v1106
          %1346 = vmatpush1.bf16.msra.mxu0 %v1105
          %1347 = vmatprep.subr.bf16.mxu0 %v1110
          %1348 = vmatpush1.bf16.msra.mxu0 %v1109
          %1349 = vmatprep.mubr.bf16.mxu0 %v1222
          %1350 = vmatmul.mubr.bf16.gmra.mrb[0].mxu0 %v1208
          %v1351 = vpop.f32.mrb[0].mxu0
          %v1352 = vadd.f32 %v1311, %v1351
          %v1353 = vpop.f32.mrb[0].mxu0
          %v1354 = vadd.f32 %v1313, %v1353
          %v1355 = vpop.f32.mrb[0].mxu0
          %v1356 = vpop.f32.mrb[0].mxu0
          %1357 = vdwg.mxu0
          %1358 = vmatprep.subr.bf16.mxu0 %v1114
          %1359 = vmatpush1.bf16.msra.mxu0 %v1113
          %1360 = vmatprep.subr.bf16.mxu0 %v1118
          %1361 = vmatpush1.bf16.msra.mxu0 %v1117
          %1362 = vmatprep.subr.bf16.mxu0 %v1122
          %1363 = vmatpush1.bf16.msra.mxu0 %v1121
          %1364 = vmatprep.subr.bf16.mxu0 %v1126
          %1365 = vmatpush1.bf16.msra.mxu0 %v1125
          %1366 = vmatprep.subr.bf16.mxu0 %v1130
          %1367 = vmatpush1.bf16.msra.mxu0 %v1129
          %1368 = vmatprep.subr.bf16.mxu0 %v1134
          %1369 = vmatpush1.bf16.msra.mxu0 %v1133
          %1370 = vmatprep.subr.bf16.mxu0 %v1138
          %1371 = vmatpush1.bf16.msra.mxu0 %v1137
          %1372 = vmatprep.subr.bf16.mxu0 %v1142
          %1373 = vmatpush1.bf16.msra.mxu0 %v1141
          %1374 = vmatprep.subr.bf16.mxu0 %v1146
          %1375 = vmatpush1.bf16.msra.mxu0 %v1145
          %1376 = vmatprep.subr.bf16.mxu0 %v1150
          %1377 = vmatpush1.bf16.msra.mxu0 %v1149
          %1378 = vmatprep.subr.bf16.mxu0 %v1154
          %1379 = vmatpush1.bf16.msra.mxu0 %v1153
          %1380 = vmatprep.subr.bf16.mxu0 %v1158
          %1381 = vmatpush1.bf16.msra.mxu0 %v1157
          %1382 = vmatprep.subr.bf16.mxu0 %v1162
          %1383 = vmatpush1.bf16.msra.mxu0 %v1161
          %1384 = vmatprep.subr.bf16.mxu0 %v1166
          %1385 = vmatpush1.bf16.msra.mxu0 %v1165
          %1386 = vmatprep.subr.bf16.mxu0 %v1170
          %1387 = vmatpush1.bf16.msra.mxu0 %v1169
          %1388 = vmatprep.subr.bf16.mxu0 %v1174
          %1389 = vmatpush1.bf16.msra.mxu0 %v1173
          %1390 = vmatprep.mubr.bf16.mxu0 %v1226
          %1391 = vmatmul.mubr.bf16.gmra.mrb[0].mxu0 %v1224
          %v1392 = vpop.f32.mrb[0].mxu0
          %v1393 = vadd.f32 %v1352, %v1392
          %v1394 = vpop.f32.mrb[0].mxu0
          %v1395 = vadd.f32 %v1354, %v1394
          %v1396 = vpop.f32.mrb[0].mxu0
          %v1397 = vpop.f32.mrb[0].mxu0
          %1398 = vdwg.mxu0
          %1399 = vmatprep.subr.bf16.mxu0 %v924
          %1400 = vmatpush1.bf16.msra.mxu0 %v923
          %1401 = vmatprep.subr.bf16.mxu0 %v928
          %1402 = vmatpush1.bf16.msra.mxu0 %v927
          %1403 = vmatprep.subr.bf16.mxu0 %v932
          %1404 = vmatpush1.bf16.msra.mxu0 %v931
          %1405 = vmatprep.subr.bf16.mxu0 %v936
          %1406 = vmatpush1.bf16.msra.mxu0 %v935
          %1407 = vmatprep.subr.bf16.mxu0 %v940
          %1408 = vmatpush1.bf16.msra.mxu0 %v939
          %1409 = vmatprep.subr.bf16.mxu0 %v944
          %1410 = vmatpush1.bf16.msra.mxu0 %v943
          %1411 = vmatprep.subr.bf16.mxu0 %v948
          %1412 = vmatpush1.bf16.msra.mxu0 %v947
          %1413 = vmatprep.subr.bf16.mxu0 %v952
          %1414 = vmatpush1.bf16.msra.mxu0 %v951
          %1415 = vmatprep.subr.bf16.mxu0 %v956
          %1416 = vmatpush1.bf16.msra.mxu0 %v955
          %1417 = vmatprep.subr.bf16.mxu0 %v960
          %1418 = vmatpush1.bf16.msra.mxu0 %v959
          %1419 = vmatprep.subr.bf16.mxu0 %v964
          %1420 = vmatpush1.bf16.msra.mxu0 %v963
          %1421 = vmatprep.subr.bf16.mxu0 %v968
          %1422 = vmatpush1.bf16.msra.mxu0 %v967
          %1423 = vmatprep.subr.bf16.mxu0 %v972
          %1424 = vmatpush1.bf16.msra.mxu0 %v971
          %1425 = vmatprep.subr.bf16.mxu0 %v976
          %1426 = vmatpush1.bf16.msra.mxu0 %v975
          %1427 = vmatprep.subr.bf16.mxu0 %v980
          %1428 = vmatpush1.bf16.msra.mxu0 %v979
          %1429 = vmatprep.subr.bf16.mxu0 %v984
          %1430 = vmatpush1.bf16.msra.mxu0 %v983
          %1431 = vmatprep.mubr.bf16.mxu0 %v1215
          %1432 = vmatmul.mubr.bf16.gmra.mrb[0].mxu0 %v1201
          %v1433 = vpop.f32.mrb[0].mxu0
          %v1434 = vadd.f32 0.0, %v1433
          %v1435 = vpop.f32.mrb[0].mxu0
          %v1436 = vadd.f32 0.0, %v1435
          %v1437 = vpop.f32.mrb[0].mxu0
          %v1438 = vpop.f32.mrb[0].mxu0
          %1439 = vdwg.mxu0
          %1440 = vmatprep.subr.bf16.mxu0 %v988
          %1441 = vmatpush1.bf16.msra.mxu0 %v987
          %1442 = vmatprep.subr.bf16.mxu0 %v992
          %1443 = vmatpush1.bf16.msra.mxu0 %v991
          %1444 = vmatprep.subr.bf16.mxu0 %v996
          %1445 = vmatpush1.bf16.msra.mxu0 %v995
          %1446 = vmatprep.subr.bf16.mxu0 %v1000
          %1447 = vmatpush1.bf16.msra.mxu0 %v999
          %1448 = vmatprep.subr.bf16.mxu0 %v1004
          %1449 = vmatpush1.bf16.msra.mxu0 %v1003
          %1450 = vmatprep.subr.bf16.mxu0 %v1008
          %1451 = vmatpush1.bf16.msra.mxu0 %v1007
          %1452 = vmatprep.subr.bf16.mxu0 %v1012
          %1453 = vmatpush1.bf16.msra.mxu0 %v1011
          %1454 = vmatprep.subr.bf16.mxu0 %v1016
          %1455 = vmatpush1.bf16.msra.mxu0 %v1015
          %1456 = vmatprep.subr.bf16.mxu0 %v1020
          %1457 = vmatpush1.bf16.msra.mxu0 %v1019
          %1458 = vmatprep.subr.bf16.mxu0 %v1024
          %1459 = vmatpush1.bf16.msra.mxu0 %v1023
          %1460 = vmatprep.subr.bf16.mxu0 %v1028
          %1461 = vmatpush1.bf16.msra.mxu0 %v1027
          %1462 = vmatprep.subr.bf16.mxu0 %v1032
          %1463 = vmatpush1.bf16.msra.mxu0 %v1031
          %1464 = vmatprep.subr.bf16.mxu0 %v1036
          %1465 = vmatpush1.bf16.msra.mxu0 %v1035
          %1466 = vmatprep.subr.bf16.mxu0 %v1040
          %1467 = vmatpush1.bf16.msra.mxu0 %v1039
          %1468 = vmatprep.subr.bf16.mxu0 %v1044
          %1469 = vmatpush1.bf16.msra.mxu0 %v1043
          %1470 = vmatprep.subr.bf16.mxu0 %v1048
          %1471 = vmatpush1.bf16.msra.mxu0 %v1047
          %1472 = vmatprep.mubr.bf16.mxu0 %v1225
          %1473 = vmatmul.mubr.bf16.gmra.mrb[0].mxu0 %v1223
          %v1474 = vpop.f32.mrb[0].mxu0
          %v1475 = vadd.f32 %v1434, %v1474
          %v1476 = vpop.f32.mrb[0].mxu0
          %v1477 = vadd.f32 %v1436, %v1476
          %v1478 = vpop.f32.mrb[0].mxu0
          %v1479 = vpop.f32.mrb[0].mxu0
          %1480 = vdwg.mxu0
          %1481 = vmatprep.subr.bf16.mxu0 %v1052
          %1482 = vmatpush1.bf16.msra.mxu0 %v1051
          %1483 = vmatprep.subr.bf16.mxu0 %v1056
          %1484 = vmatpush1.bf16.msra.mxu0 %v1055
          %1485 = vmatprep.subr.bf16.mxu0 %v1060
          %1486 = vmatpush1.bf16.msra.mxu0 %v1059
          %1487 = vmatprep.subr.bf16.mxu0 %v1064
          %1488 = vmatpush1.bf16.msra.mxu0 %v1063
          %1489 = vmatprep.subr.bf16.mxu0 %v1068
          %1490 = vmatpush1.bf16.msra.mxu0 %v1067
          %1491 = vmatprep.subr.bf16.mxu0 %v1072
          %1492 = vmatpush1.bf16.msra.mxu0 %v1071
          %1493 = vmatprep.subr.bf16.mxu0 %v1076
          %1494 = vmatpush1.bf16.msra.mxu0 %v1075
          %1495 = vmatprep.subr.bf16.mxu0 %v1080
          %1496 = vmatpush1.bf16.msra.mxu0 %v1079
          %1497 = vmatprep.subr.bf16.mxu0 %v1084
          %1498 = vmatpush1.bf16.msra.mxu0 %v1083
          %1499 = vmatprep.subr.bf16.mxu0 %v1088
          %1500 = vmatpush1.bf16.msra.mxu0 %v1087
          %1501 = vmatprep.subr.bf16.mxu0 %v1092
          %1502 = vmatpush1.bf16.msra.mxu0 %v1091
          %1503 = vmatprep.subr.bf16.mxu0 %v1096
          %1504 = vmatpush1.bf16.msra.mxu0 %v1095
          %1505 = vmatprep.subr.bf16.mxu0 %v1100
          %1506 = vmatpush1.bf16.msra.mxu0 %v1099
          %1507 = vmatprep.subr.bf16.mxu0 %v1104
          %1508 = vmatpush1.bf16.msra.mxu0 %v1103
          %1509 = vmatprep.subr.bf16.mxu0 %v1108
          %1510 = vmatpush1.bf16.msra.mxu0 %v1107
          %1511 = vmatprep.subr.bf16.mxu0 %v1112
          %1512 = vmatpush1.bf16.msra.mxu0 %v1111
          %1513 = vmatprep.mubr.bf16.mxu0 %v1222
          %1514 = vmatmul.mubr.bf16.gmra.mrb[0].mxu0 %v1208
          %v1515 = vpop.f32.mrb[0].mxu0
          %v1516 = vadd.f32 %v1475, %v1515
          %v1517 = vpop.f32.mrb[0].mxu0
          %v1518 = vadd.f32 %v1477, %v1517
          %v1519 = vpop.f32.mrb[0].mxu0
          %v1520 = vpop.f32.mrb[0].mxu0
          %1521 = vdwg.mxu0
          %1522 = vmatprep.subr.bf16.mxu0 %v1116
          %1523 = vmatpush1.bf16.msra.mxu0 %v1115
          %1524 = vmatprep.subr.bf16.mxu0 %v1120
          %1525 = vmatpush1.bf16.msra.mxu0 %v1119
          %1526 = vmatprep.subr.bf16.mxu0 %v1124
          %1527 = vmatpush1.bf16.msra.mxu0 %v1123
          %1528 = vmatprep.subr.bf16.mxu0 %v1128
          %1529 = vmatpush1.bf16.msra.mxu0 %v1127
          %1530 = vmatprep.subr.bf16.mxu0 %v1132
          %1531 = vmatpush1.bf16.msra.mxu0 %v1131
          %1532 = vmatprep.subr.bf16.mxu0 %v1136
          %1533 = vmatpush1.bf16.msra.mxu0 %v1135
          %1534 = vmatprep.subr.bf16.mxu0 %v1140
          %1535 = vmatpush1.bf16.msra.mxu0 %v1139
          %1536 = vmatprep.subr.bf16.mxu0 %v1144
          %1537 = vmatpush1.bf16.msra.mxu0 %v1143
          %1538 = vmatprep.subr.bf16.mxu0 %v1148
          %1539 = vmatpush1.bf16.msra.mxu0 %v1147
          %1540 = vmatprep.subr.bf16.mxu0 %v1152
          %1541 = vmatpush1.bf16.msra.mxu0 %v1151
          %1542 = vmatprep.subr.bf16.mxu0 %v1156
          %1543 = vmatpush1.bf16.msra.mxu0 %v1155
          %1544 = vmatprep.subr.bf16.mxu0 %v1160
          %1545 = vmatpush1.bf16.msra.mxu0 %v1159
          %1546 = vmatprep.subr.bf16.mxu0 %v1164
          %1547 = vmatpush1.bf16.msra.mxu0 %v1163
          %1548 = vmatprep.subr.bf16.mxu0 %v1168
          %1549 = vmatpush1.bf16.msra.mxu0 %v1167
          %1550 = vmatprep.subr.bf16.mxu0 %v1172
          %1551 = vmatpush1.bf16.msra.mxu0 %v1171
          %1552 = vmatprep.subr.bf16.mxu0 %v1176
          %1553 = vmatpush1.bf16.msra.mxu0 %v1175
          %1554 = vmatprep.mubr.bf16.mxu0 %v1226
          %1555 = vmatmul.mubr.bf16.gmra.mrb[0].mxu0 %v1224
          %v1556 = vpop.f32.mrb[0].mxu0
          %v1557 = vadd.f32 %v1516, %v1556
          %v1558 = vpop.f32.mrb[0].mxu0
          %v1559 = vadd.f32 %v1518, %v1558
          %v1560 = vpop.f32.mrb[0].mxu0
          %v1561 = vpop.f32.mrb[0].mxu0
          %1562 = vdwg.mxu0
          %s1563 = smul.addr %s917, 2
          %s1564 = scalar_lea.vmem [#allocation3], %s1563
          %v1565 = vld [vmem:[%s1564] sm:$0xff]
          %v1570 = vrot.slane %v1393, 1
          %v1571 = vrot.slane %v1395, 1
          %v1572 = vrot.slane %v1557, 1
          %v1573 = vrot.slane %v1559, 1
          %v1578 = vadd.f32 %v1393, %v1570
          %v1579 = vadd.f32 %v1395, %v1571
          %v1580 = vadd.f32 %v1557, %v1572
          %v1581 = vadd.f32 %v1559, %v1573
          %v1582 = vlaneseq
          %v1583 = vshrl.u32 %v1582, 7
          %v1584 = vsub.s32 0, %v1583
          %v1585 = vrot.slane %v1578, %v1584
          %v1586 = vlaneseq
          %v1587 = vshrl.u32 %v1586, 7
          %v1588 = vsub.s32 0, %v1587
          %v1589 = vrot.slane %v1579, %v1588
          %v1590 = vlaneseq
          %v1591 = vshrl.u32 %v1590, 7
          %v1592 = vsub.s32 0, %v1591
          %v1593 = vrot.slane %v1580, %v1592
          %v1594 = vlaneseq
          %v1595 = vshrl.u32 %v1594, 7
          %v1596 = vsub.s32 0, %v1595
          %v1597 = vrot.slane %v1581, %v1596
          %v1598 = vsub.f32 %v1585, %v1393
          %v1599 = vsub.f32 %v1589, %v1395
          %v1600 = vsub.f32 %v1593, %v1557
          %v1601 = vsub.f32 %v1597, %v1559
          %v1606 = vcombine.low %v1598, %v1599
          %v1607 = vcombine.low %v1600, %v1601
          %v1609 = vunpack.c.l.s4 1983009808
          %v1610 = vunpack.c.0.s8 %v1609
          %v1611 = vlaneseq
          %v1612 = vshrl.u32 %v1611, 7
          %v1613 = vsub.s32 %v1610, %v1612
          %v1614 = vrot.slane %v1606, %v1613
          %v1616 = vunpack.c.l.s4 1983009808
          %v1617 = vunpack.c.0.s8 %v1616
          %v1618 = vlaneseq
          %v1619 = vshrl.u32 %v1618, 7
          %v1620 = vsub.s32 %v1617, %v1619
          %v1621 = vrot.slane %v1607, %v1620
          %v1622 = vcombine.low %v1614, %v1621
          %v1624 = vsub.f32 %v1565, %v1622
          %s1625 = smul.addr %s917, 2
          %s1626 = scalar_lea.vmem [#allocation4], %s1625
          %1627 = vst [vmem:[%s1626] sm:$0xff] %v1624
          %p1628 = scmp.eq.s32.totalorder %s27, 3
          // Predicated region
          $region69: #{tpu_custom_call.1} parent=59 // pred_check
            %p1629 = pneg %p1628
          $region70: #{tpu_custom_call.1} parent=59 // pred_check_branch
            %1631 = sbr.rel (%p1629) target = $region72
          $region71: #{tpu_custom_call.1} parent=59 // pred_region
            %v1633 = vrot.slane %v1624, 7
            %v1634 = vrot.slane %v1633, 2
            %v1636 = vmax.f32 %v1624, %v1634
            %v1638 = vlaneseq
            %v1639 = vshrl.u32 %v1638, 7
            %v1640 = vsub.s32 0, %v1639
            %v1641 = vrot.slane %v1636, %v1640
            %v1642 = vlaneseq
            %v1643 = vshrl.u32 %v1642, 7
            %v1644 = vsub.s32 2, %v1643
            %v1645 = vrot.slane %v1636, %v1644
            %v1646 = vlaneseq
            %v1647 = vshrl.u32 %v1646, 7
            %v1648 = vsub.s32 4, %v1647
            %v1649 = vrot.slane %v1636, %v1648
            %v1650 = vlaneseq
            %v1651 = vshrl.u32 %v1650, 7
            %v1652 = vsub.s32 6, %v1651
            %v1653 = vrot.slane %v1636, %v1652
            %v1658 = vlaneseq
            %v1659 = vshrl.u32 %v1658, 7
            %v1660 = vsub.s32 0, %v1659
            %v1661 = vrot.slane %v1641, %v1660
            %v1662 = vlaneseq
            %v1663 = vshrl.u32 %v1662, 7
            %v1664 = vsub.s32 0, %v1663
            %v1665 = vrot.slane %v1645, %v1664
            %v1666 = vlaneseq
            %v1667 = vshrl.u32 %v1666, 7
            %v1668 = vsub.s32 0, %v1667
            %v1669 = vrot.slane %v1649, %v1668
            %v1670 = vlaneseq
            %v1671 = vshrl.u32 %v1670, 7
            %v1672 = vsub.s32 0, %v1671
            %v1673 = vrot.slane %v1653, %v1672
            %v1678 = vcombine.low %v1661, %v1665
            %v1679 = vcombine.low %v1669, %v1673
            %v1681 = vunpack.c.l.s4 1983009808
            %v1682 = vunpack.c.0.s8 %v1681
            %v1683 = vlaneseq
            %v1684 = vshrl.u32 %v1683, 7
            %v1685 = vsub.s32 %v1682, %v1684
            %v1686 = vrot.slane %v1678, %v1685
            %v1688 = vunpack.c.l.s4 1983009808
            %v1689 = vunpack.c.0.s8 %v1688
            %v1690 = vlaneseq
            %v1691 = vshrl.u32 %v1690, 7
            %v1692 = vsub.s32 %v1689, %v1691
            %v1693 = vrot.slane %v1679, %v1692
            %v1694 = vcombine.low %v1686, %v1693
            %v1696 = vsub.f32 %v1624, %v1694
            %v1697 = vmul.f32 %v1696, 1.442695
            %v1698 = vpow.pop %v1697
            %v1700 = vrot.slane %v1698, 7
            %v1701 = vrot.slane %v1700, 2
            %v1703 = vadd.f32 %v1698, %v1701
            %v1705 = vlaneseq
            %v1706 = vshrl.u32 %v1705, 7
            %v1707 = vsub.s32 0, %v1706
            %v1708 = vrot.slane %v1703, %v1707
            %v1709 = vlaneseq
            %v1710 = vshrl.u32 %v1709, 7
            %v1711 = vsub.s32 2, %v1710
            %v1712 = vrot.slane %v1703, %v1711
            %v1713 = vlaneseq
            %v1714 = vshrl.u32 %v1713, 7
            %v1715 = vsub.s32 4, %v1714
            %v1716 = vrot.slane %v1703, %v1715
            %v1717 = vlaneseq
            %v1718 = vshrl.u32 %v1717, 7
            %v1719 = vsub.s32 6, %v1718
            %v1720 = vrot.slane %v1703, %v1719
            %v1725 = vlaneseq
            %v1726 = vshrl.u32 %v1725, 7
            %v1727 = vsub.s32 0, %v1726
            %v1728 = vrot.slane %v1708, %v1727
            %v1729 = vlaneseq
            %v1730 = vshrl.u32 %v1729, 7
            %v1731 = vsub.s32 0, %v1730
            %v1732 = vrot.slane %v1712, %v1731
            %v1733 = vlaneseq
            %v1734 = vshrl.u32 %v1733, 7
            %v1735 = vsub.s32 0, %v1734
            %v1736 = vrot.slane %v1716, %v1735
            %v1737 = vlaneseq
            %v1738 = vshrl.u32 %v1737, 7
            %v1739 = vsub.s32 0, %v1738
            %v1740 = vrot.slane %v1720, %v1739
            %v1745 = vcombine.low %v1728, %v1732
            %v1746 = vcombine.low %v1736, %v1740
            %v1748 = vunpack.c.l.s4 1983009808
            %v1749 = vunpack.c.0.s8 %v1748
            %v1750 = vlaneseq
            %v1751 = vshrl.u32 %v1750, 7
            %v1752 = vsub.s32 %v1749, %v1751
            %v1753 = vrot.slane %v1745, %v1752
            %v1755 = vunpack.c.l.s4 1983009808
            %v1756 = vunpack.c.0.s8 %v1755
            %v1757 = vlaneseq
            %v1758 = vshrl.u32 %v1757, 7
            %v1759 = vsub.s32 %v1756, %v1758
            %v1760 = vrot.slane %v1746, %v1759
            %v1761 = vcombine.low %v1753, %v1760
            %v1763 = vrcp.pop %v1761
            %v1764 = vmul.f32 %v1698, %v1763
            %1765 = vst [vmem:[%s253] sm:$0xff] %v1764
          $region72: #{tpu_custom_call.1} parent=59 // pred_fallthru
            _
        $region60: #{tpu_custom_call.1} parent=35 // pred_fallthru
          _
        %s1766 = sand.u32 %s132, 1
        %s1767 = scalar_lea.sflag [#allocation9], %s1766
        %s1768 = sand.u32 %s132, 1
        %s1769 = smul.addr %s1768, 8
        %s1770 = scalar_lea.vmem [#allocation13], %s1769
        // Predicated region
        $region73: #{tpu_custom_call.1} parent=35 // pred_check
          %p1771 = pneg %p142
        $region74: #{tpu_custom_call.1} parent=35 // pred_check_branch
          %1773 = sbr.rel (%p1771) target = $region76
        $region75: #{tpu_custom_call.1} parent=35 // pred_region
          %s1774 = smul.u32 4, %s28
          %s1776 = ssub.s32 128, 128
          %1777 = vsyncadd %s1767, %s1776
          %s1778 = smul.addr %s1774, 32
          %s1779 = scalar_lea.hbm %s5, %s1778
          %s1781 = sshll.u32 %s1770, 4
          %s1782 = int_to_ptr.vmem [resolvable:$true] %s1781
          %1784 = dma.vmem_to_hbm [thread:$0]  %s1782, 128, %s1779, %s1767
        $region76: #{tpu_custom_call.1} parent=35 // pred_fallthru
          _
      $region36: #{tpu_custom_call.1} parent=5 // pred_fallthru
        _
      %p1785 = scmp.le.s32.totalorder 2, %s18
      // Predicated region
      $region77: #{tpu_custom_call.1} parent=5 // pred_check
        %p1786 = pneg %p1785
      $region78: #{tpu_custom_call.1} parent=5 // pred_check_branch
        %1788 = sbr.rel (%p1786) target = $region80
      $region79: #{tpu_custom_call.1} parent=5 // pred_region
        %s1789 = ssub.s32 %s18, 2
        // Predicated region
        $region81: #{tpu_custom_call.1} parent=79 // pred_check
          %p1790 = pneg %p148
        $region82: #{tpu_custom_call.1} parent=79 // pred_check_branch
          %1792 = sbr.rel (%p1790) target = $region84
        $region83: #{tpu_custom_call.1} parent=79 // pred_region
          %s1793 = sand.u32 %s133, 1
          %s1794 = scalar_lea.sflag [#allocation9], %s1793
          %s1795 = sand.u32 %s133, 1
          %s1796 = smul.addr %s1795, 8
          %s1797 = scalar_lea.vmem [#allocation13], %s1796
          %1798 = dma.done %s1794, 128
        $region84: #{tpu_custom_call.1} parent=79 // pred_fallthru
          _
      $region80: #{tpu_custom_call.1} parent=5 // pred_fallthru
        _
    $region6: #{tpu_custom_call.1} parent=1 // loop_footer
      %s22 = sadd.s32 1, %s18
    $region7: #{tpu_custom_call.1} parent=1 // loop_footer_branch
      %17 = sbr.rel target = $region3
    $region8: #{tpu_custom_call.1} parent=1 // loop_exit
      _
    %1799 = vsyncpa [#allocation8], 1
    %s1800 = scalar_lea.sflag [#allocation8], 1
    %1801 = vsyncpa %s1800, 1
    %1802 = vsyncpa [#allocation11], 1
    %1803 = vsyncpa [#allocation9], 1
    %s1804 = scalar_lea.sflag [#allocation9], 1
    %1805 = vsyncpa %s1804, 1
  %1806 = vsyncmov [#allocation6]
  %s1807 = vpop.sfrf %1806
  %p1808 = scmp.eq.s32.totalorder %s1807, 0
  %p1809 = pneg %p1808
  %1811 = shalt.err (%p1809)

</llo_original>
